<compile_context>
chip_gen: v5e
topology: v5e:2x2
jax: 0.10.0
libtpu: 0.0.40
codegen_flags: <defaults>
</compile_context>

<pallas_src>
import jax
import jax.numpy as jnp
from jax.experimental import pallas as pl
from jax.experimental.pallas import tpu as pltpu

KH = KW = 3  # fixed 3x3 kernel


def conv3x3_kernel(x_ref, w_ref, b_ref, o_ref):
    # x_ref: (1, Cin, H, W)       one image, VMEM
    # w_ref: (Cout, Cin*KH*KW)    SMEM, row k = ci*9 + kh*3 + kw (matches OIHW flatten)
    # b_ref: (Cout,)              SMEM
    # o_ref: (1, Cout, Ho, Wo)    VMEM
    _, Cin, H, W = x_ref.shape
    Cout = o_ref.shape[1]
    Ho, Wo = H - KH + 1, W - KW + 1

    x = x_ref[0]                                    # (Cin, H, W) f32

    # Build the 27 shifted windows once; shared across all output channels.
    windows = []
    for ci in range(Cin):
        xc = x[ci]                                  # (H, W)
        for kh in range(KH):
            rows = xc[kh:kh + Ho, :]                # sublane-offset slice
            for kw in range(KW):
                windows.append(rows[:, kw:kw + Wo])  # (Ho, Wo)

    # Shift-and-accumulate on the VPU: 27 scalar*vector FMAs per output channel.
    accs = []
    for co in range(Cout):
        acc = jnp.full((Ho, Wo), b_ref[co], dtype=jnp.float32)
        for k, win in enumerate(windows):
            acc = acc + w_ref[co, k] * win
        accs.append(acc)

    # Single block store (leading-axis stack -> no lane/sublane shuffle).
    o_ref[0] = jnp.stack(accs, axis=0).astype(o_ref.dtype)


def austin_forward(x_nchw, w_oihw, b):
    """Conv2d(3->6, k=3, stride=1, pad=0). x: (N,3,H,W) -> (N,6,H-2,W-2)."""
    N, Cin, H, W = x_nchw.shape
    Cout = w_oihw.shape[0]
    Ho, Wo = H - KH + 1, W - KW + 1
    K = Cin * KH * KW

    w2 = w_oihw.reshape(Cout, K)        # contiguous OIHW flatten (row k = ci*9+kh*3+kw)

    flops = 2 * N * Ho * Wo * K * Cout
    bytes_accessed = 4 * (x_nchw.size + w2.size + b.size + N * Cout * Ho * Wo)

    return pl.pallas_call(
        conv3x3_kernel,
        out_shape=jax.ShapeDtypeStruct((N, Cout, Ho, Wo), x_nchw.dtype),
        grid=(N,),
        in_specs=[
            pl.BlockSpec((1, Cin, H, W), lambda n: (n, 0, 0, 0)),
            pl.BlockSpec(memory_space=pltpu.MemorySpace.SMEM),   # weights as scalars
            pl.BlockSpec(memory_space=pltpu.MemorySpace.SMEM),   # bias as scalars
        ],
        out_specs=pl.BlockSpec((1, Cout, Ho, Wo), lambda n: (n, 0, 0, 0)),
        compiler_params=pltpu.CompilerParams(
            dimension_semantics=("parallel",),      # megacore: batch split on v7x
            vmem_limit_bytes=32 * 1024 * 1024,      # explicit, fits v7x's smaller VMEM
        ),
        cost_estimate=pl.CostEstimate(flops=flops, transcendentals=0,
                                      bytes_accessed=bytes_accessed),
    )(x_nchw, w2, b)


if __name__ == "__main__":
    key = jax.random.PRNGKey(0)
    k_x, k_w, k_b = jax.random.split(key, 3)

    # Conv2d(3, 6, 3) shapes; small deterministic inputs.
    N, Cin, H, W = 2, 3, 16, 16
    Cout = 6
    x = jax.random.normal(k_x, (N, Cin, H, W), jnp.float32)
    fan_in = Cin * KH * KW
    bound = 1.0 / (fan_in ** 0.5)
    weight = jax.random.uniform(k_w, (Cout, Cin, KH, KW), jnp.float32,
                                minval=-bound, maxval=bound)
    bias = jax.random.uniform(k_b, (Cout,), jnp.float32,
                              minval=-bound, maxval=bound)

    out = austin_forward(x, weight, bias)
    out = jax.block_until_ready(out)
    assert out.shape == (N, Cout, H - 2, W - 2)

    # sanity check against XLA's conv
    ref = jax.lax.conv_general_dilated(
        x, weight, window_strides=(1, 1), padding="VALID",
        dimension_numbers=("NCHW", "OIHW", "NCHW")) + bias.reshape(1, Cout, 1, 1)
    assert jnp.allclose(out, ref, atol=1e-5, rtol=1e-5), "mismatch vs reference conv"

    print("KERNEL_OK")
</pallas_src>

<mosaic_0001>
module attributes {stable_mosaic.version = 11 : i64} {
  func.func @conv3x3_kernel(%arg0: i32, %arg1: memref<1x3x16x16xf32, #tpu.memory_space<vmem>>, %arg2: memref<6x27xf32, #tpu.memory_space<smem>>, %arg3: memref<6xf32, #tpu.memory_space<smem>>, %arg4: memref<1x6x14x14xf32, #tpu.memory_space<vmem>>) attributes {dimension_semantics = [#tpu.dimension_semantics<parallel>], iteration_bounds = array<i64: 2>, scalar_prefetch = 0 : i64, scratch_operands = 0 : i64, tpu.core_type = #tpu.core_type<tc>, window_params = [{transform_indices = @transform_0, window_bounds = array<i64: 1, 3, 16, 16>}, {transform_indices = @transform_1, window_bounds = array<i64: 6, 27>}, {transform_indices = @transform_2, window_bounds = array<i64: 6>}, {transform_indices = @transform_3, window_bounds = array<i64: 1, 6, 14, 14>}]} {
    %c0 = arith.constant 0 : index
    %c0_0 = arith.constant 0 : index
    %c0_1 = arith.constant 0 : index
    %c0_2 = arith.constant 0 : index
    %0 = vector.load %arg1[%c0, %c0_0, %c0_1, %c0_2] : memref<1x3x16x16xf32, #tpu.memory_space<vmem>>, vector<1x3x16x16xf32>
    %1 = vector.shape_cast %0 : vector<1x3x16x16xf32> to vector<3x16x16xf32>
    %2 = vector.extract_strided_slice %1 {offsets = [0, 0, 0], sizes = [1, 16, 16], strides = [1, 1, 1]} : vector<3x16x16xf32> to vector<1x16x16xf32>
    %3 = vector.shape_cast %2 : vector<1x16x16xf32> to vector<16x16xf32>
    %4 = vector.extract_strided_slice %3 {offsets = [0, 0], sizes = [14, 16], strides = [1, 1]} : vector<16x16xf32> to vector<14x16xf32>
    %5 = vector.extract_strided_slice %4 {offsets = [0, 0], sizes = [14, 14], strides = [1, 1]} : vector<14x16xf32> to vector<14x14xf32>
    %6 = vector.extract_strided_slice %4 {offsets = [0, 1], sizes = [14, 14], strides = [1, 1]} : vector<14x16xf32> to vector<14x14xf32>
    %7 = vector.extract_strided_slice %4 {offsets = [0, 2], sizes = [14, 14], strides = [1, 1]} : vector<14x16xf32> to vector<14x14xf32>
    %8 = vector.extract_strided_slice %3 {offsets = [1, 0], sizes = [14, 16], strides = [1, 1]} : vector<16x16xf32> to vector<14x16xf32>
    %9 = vector.extract_strided_slice %8 {offsets = [0, 0], sizes = [14, 14], strides = [1, 1]} : vector<14x16xf32> to vector<14x14xf32>
    %10 = vector.extract_strided_slice %8 {offsets = [0, 1], sizes = [14, 14], strides = [1, 1]} : vector<14x16xf32> to vector<14x14xf32>
    %11 = vector.extract_strided_slice %8 {offsets = [0, 2], sizes = [14, 14], strides = [1, 1]} : vector<14x16xf32> to vector<14x14xf32>
    %12 = vector.extract_strided_slice %3 {offsets = [2, 0], sizes = [14, 16], strides = [1, 1]} : vector<16x16xf32> to vector<14x16xf32>
    %13 = vector.extract_strided_slice %12 {offsets = [0, 0], sizes = [14, 14], strides = [1, 1]} : vector<14x16xf32> to vector<14x14xf32>
    %14 = vector.extract_strided_slice %12 {offsets = [0, 1], sizes = [14, 14], strides = [1, 1]} : vector<14x16xf32> to vector<14x14xf32>
    %15 = vector.extract_strided_slice %12 {offsets = [0, 2], sizes = [14, 14], strides = [1, 1]} : vector<14x16xf32> to vector<14x14xf32>
    %16 = vector.extract_strided_slice %1 {offsets = [1, 0, 0], sizes = [1, 16, 16], strides = [1, 1, 1]} : vector<3x16x16xf32> to vector<1x16x16xf32>
    %17 = vector.shape_cast %16 : vector<1x16x16xf32> to vector<16x16xf32>
    %18 = vector.extract_strided_slice %17 {offsets = [0, 0], sizes = [14, 16], strides = [1, 1]} : vector<16x16xf32> to vector<14x16xf32>
    %19 = vector.extract_strided_slice %18 {offsets = [0, 0], sizes = [14, 14], strides = [1, 1]} : vector<14x16xf32> to vector<14x14xf32>
    %20 = vector.extract_strided_slice %18 {offsets = [0, 1], sizes = [14, 14], strides = [1, 1]} : vector<14x16xf32> to vector<14x14xf32>
    %21 = vector.extract_strided_slice %18 {offsets = [0, 2], sizes = [14, 14], strides = [1, 1]} : vector<14x16xf32> to vector<14x14xf32>
    %22 = vector.extract_strided_slice %17 {offsets = [1, 0], sizes = [14, 16], strides = [1, 1]} : vector<16x16xf32> to vector<14x16xf32>
    %23 = vector.extract_strided_slice %22 {offsets = [0, 0], sizes = [14, 14], strides = [1, 1]} : vector<14x16xf32> to vector<14x14xf32>
    %24 = vector.extract_strided_slice %22 {offsets = [0, 1], sizes = [14, 14], strides = [1, 1]} : vector<14x16xf32> to vector<14x14xf32>
    %25 = vector.extract_strided_slice %22 {offsets = [0, 2], sizes = [14, 14], strides = [1, 1]} : vector<14x16xf32> to vector<14x14xf32>
    %26 = vector.extract_strided_slice %17 {offsets = [2, 0], sizes = [14, 16], strides = [1, 1]} : vector<16x16xf32> to vector<14x16xf32>
    %27 = vector.extract_strided_slice %26 {offsets = [0, 0], sizes = [14, 14], strides = [1, 1]} : vector<14x16xf32> to vector<14x14xf32>
    %28 = vector.extract_strided_slice %26 {offsets = [0, 1], sizes = [14, 14], strides = [1, 1]} : vector<14x16xf32> to vector<14x14xf32>
    %29 = vector.extract_strided_slice %26 {offsets = [0, 2], sizes = [14, 14], strides = [1, 1]} : vector<14x16xf32> to vector<14x14xf32>
    %30 = vector.extract_strided_slice %1 {offsets = [2, 0, 0], sizes = [1, 16, 16], strides = [1, 1, 1]} : vector<3x16x16xf32> to vector<1x16x16xf32>
    %31 = vector.shape_cast %30 : vector<1x16x16xf32> to vector<16x16xf32>
    %32 = vector.extract_strided_slice %31 {offsets = [0, 0], sizes = [14, 16], strides = [1, 1]} : vector<16x16xf32> to vector<14x16xf32>
    %33 = vector.extract_strided_slice %32 {offsets = [0, 0], sizes = [14, 14], strides = [1, 1]} : vector<14x16xf32> to vector<14x14xf32>
    %34 = vector.extract_strided_slice %32 {offsets = [0, 1], sizes = [14, 14], strides = [1, 1]} : vector<14x16xf32> to vector<14x14xf32>
    %35 = vector.extract_strided_slice %32 {offsets = [0, 2], sizes = [14, 14], strides = [1, 1]} : vector<14x16xf32> to vector<14x14xf32>
    %36 = vector.extract_strided_slice %31 {offsets = [1, 0], sizes = [14, 16], strides = [1, 1]} : vector<16x16xf32> to vector<14x16xf32>
    %37 = vector.extract_strided_slice %36 {offsets = [0, 0], sizes = [14, 14], strides = [1, 1]} : vector<14x16xf32> to vector<14x14xf32>
    %38 = vector.extract_strided_slice %36 {offsets = [0, 1], sizes = [14, 14], strides = [1, 1]} : vector<14x16xf32> to vector<14x14xf32>
    %39 = vector.extract_strided_slice %36 {offsets = [0, 2], sizes = [14, 14], strides = [1, 1]} : vector<14x16xf32> to vector<14x14xf32>
    %40 = vector.extract_strided_slice %31 {offsets = [2, 0], sizes = [14, 16], strides = [1, 1]} : vector<16x16xf32> to vector<14x16xf32>
    %41 = vector.extract_strided_slice %40 {offsets = [0, 0], sizes = [14, 14], strides = [1, 1]} : vector<14x16xf32> to vector<14x14xf32>
    %42 = vector.extract_strided_slice %40 {offsets = [0, 1], sizes = [14, 14], strides = [1, 1]} : vector<14x16xf32> to vector<14x14xf32>
    %43 = vector.extract_strided_slice %40 {offsets = [0, 2], sizes = [14, 14], strides = [1, 1]} : vector<14x16xf32> to vector<14x14xf32>
    %c0_3 = arith.constant 0 : index
    %44 = memref.load %arg3[%c0_3] : memref<6xf32, #tpu.memory_space<smem>>
    %45 = vector.broadcast %44 : f32 to vector<14x14xf32>
    %c0_4 = arith.constant 0 : index
    %c0_5 = arith.constant 0 : index
    %46 = memref.load %arg2[%c0_4, %c0_5] : memref<6x27xf32, #tpu.memory_space<smem>>
    %47 = vector.broadcast %46 : f32 to vector<14x14xf32>
    %48 = arith.mulf %47, %5 : vector<14x14xf32>
    %49 = arith.addf %45, %48 : vector<14x14xf32>
    %c0_6 = arith.constant 0 : index
    %c1 = arith.constant 1 : index
    %50 = memref.load %arg2[%c0_6, %c1] : memref<6x27xf32, #tpu.memory_space<smem>>
    %51 = vector.broadcast %50 : f32 to vector<14x14xf32>
    %52 = arith.mulf %51, %6 : vector<14x14xf32>
    %53 = arith.addf %49, %52 : vector<14x14xf32>
    %c0_7 = arith.constant 0 : index
    %c2 = arith.constant 2 : index
    %54 = memref.load %arg2[%c0_7, %c2] : memref<6x27xf32, #tpu.memory_space<smem>>
    %55 = vector.broadcast %54 : f32 to vector<14x14xf32>
    %56 = arith.mulf %55, %7 : vector<14x14xf32>
    %57 = arith.addf %53, %56 : vector<14x14xf32>
    %c0_8 = arith.constant 0 : index
    %c3 = arith.constant 3 : index
    %58 = memref.load %arg2[%c0_8, %c3] : memref<6x27xf32, #tpu.memory_space<smem>>
    %59 = vector.broadcast %58 : f32 to vector<14x14xf32>
    %60 = arith.mulf %59, %9 : vector<14x14xf32>
    %61 = arith.addf %57, %60 : vector<14x14xf32>
    %c0_9 = arith.constant 0 : index
    %c4 = arith.constant 4 : index
    %62 = memref.load %arg2[%c0_9, %c4] : memref<6x27xf32, #tpu.memory_space<smem>>
    %63 = vector.broadcast %62 : f32 to vector<14x14xf32>
    %64 = arith.mulf %63, %10 : vector<14x14xf32>
    %65 = arith.addf %61, %64 : vector<14x14xf32>
    %c0_10 = arith.constant 0 : index
    %c5 = arith.constant 5 : index
    %66 = memref.load %arg2[%c0_10, %c5] : memref<6x27xf32, #tpu.memory_space<smem>>
    %67 = vector.broadcast %66 : f32 to vector<14x14xf32>
    %68 = arith.mulf %67, %11 : vector<14x14xf32>
    %69 = arith.addf %65, %68 : vector<14x14xf32>
    %c0_11 = arith.constant 0 : index
    %c6 = arith.constant 6 : index
    %70 = memref.load %arg2[%c0_11, %c6] : memref<6x27xf32, #tpu.memory_space<smem>>
    %71 = vector.broadcast %70 : f32 to vector<14x14xf32>
    %72 = arith.mulf %71, %13 : vector<14x14xf32>
    %73 = arith.addf %69, %72 : vector<14x14xf32>
    %c0_12 = arith.constant 0 : index
    %c7 = arith.constant 7 : index
    %74 = memref.load %arg2[%c0_12, %c7] : memref<6x27xf32, #tpu.memory_space<smem>>
    %75 = vector.broadcast %74 : f32 to vector<14x14xf32>
    %76 = arith.mulf %75, %14 : vector<14x14xf32>
    %77 = arith.addf %73, %76 : vector<14x14xf32>
    %c0_13 = arith.constant 0 : index
    %c8 = arith.constant 8 : index
    %78 = memref.load %arg2[%c0_13, %c8] : memref<6x27xf32, #tpu.memory_space<smem>>
    %79 = vector.broadcast %78 : f32 to vector<14x14xf32>
    %80 = arith.mulf %79, %15 : vector<14x14xf32>
    %81 = arith.addf %77, %80 : vector<14x14xf32>
    %c0_14 = arith.constant 0 : index
    %c9 = arith.constant 9 : index
    %82 = memref.load %arg2[%c0_14, %c9] : memref<6x27xf32, #tpu.memory_space<smem>>
    %83 = vector.broadcast %82 : f32 to vector<14x14xf32>
    %84 = arith.mulf %83, %19 : vector<14x14xf32>
    %85 = arith.addf %81, %84 : vector<14x14xf32>
    %c0_15 = arith.constant 0 : index
    %c10 = arith.constant 10 : index
    %86 = memref.load %arg2[%c0_15, %c10] : memref<6x27xf32, #tpu.memory_space<smem>>
    %87 = vector.broadcast %86 : f32 to vector<14x14xf32>
    %88 = arith.mulf %87, %20 : vector<14x14xf32>
    %89 = arith.addf %85, %88 : vector<14x14xf32>
    %c0_16 = arith.constant 0 : index
    %c11 = arith.constant 11 : index
    %90 = memref.load %arg2[%c0_16, %c11] : memref<6x27xf32, #tpu.memory_space<smem>>
    %91 = vector.broadcast %90 : f32 to vector<14x14xf32>
    %92 = arith.mulf %91, %21 : vector<14x14xf32>
    %93 = arith.addf %89, %92 : vector<14x14xf32>
    %c0_17 = arith.constant 0 : index
    %c12 = arith.constant 12 : index
    %94 = memref.load %arg2[%c0_17, %c12] : memref<6x27xf32, #tpu.memory_space<smem>>
    %95 = vector.broadcast %94 : f32 to vector<14x14xf32>
    %96 = arith.mulf %95, %23 : vector<14x14xf32>
    %97 = arith.addf %93, %96 : vector<14x14xf32>
    %c0_18 = arith.constant 0 : index
    %c13 = arith.constant 13 : index
    %98 = memref.load %arg2[%c0_18, %c13] : memref<6x27xf32, #tpu.memory_space<smem>>
    %99 = vector.broadcast %98 : f32 to vector<14x14xf32>
    %100 = arith.mulf %99, %24 : vector<14x14xf32>
    %101 = arith.addf %97, %100 : vector<14x14xf32>
    %c0_19 = arith.constant 0 : index
    %c14 = arith.constant 14 : index
    %102 = memref.load %arg2[%c0_19, %c14] : memref<6x27xf32, #tpu.memory_space<smem>>
    %103 = vector.broadcast %102 : f32 to vector<14x14xf32>
    %104 = arith.mulf %103, %25 : vector<14x14xf32>
    %105 = arith.addf %101, %104 : vector<14x14xf32>
    %c0_20 = arith.constant 0 : index
    %c15 = arith.constant 15 : index
    %106 = memref.load %arg2[%c0_20, %c15] : memref<6x27xf32, #tpu.memory_space<smem>>
    %107 = vector.broadcast %106 : f32 to vector<14x14xf32>
    %108 = arith.mulf %107, %27 : vector<14x14xf32>
    %109 = arith.addf %105, %108 : vector<14x14xf32>
    %c0_21 = arith.constant 0 : index
    %c16 = arith.constant 16 : index
    %110 = memref.load %arg2[%c0_21, %c16] : memref<6x27xf32, #tpu.memory_space<smem>>
    %111 = vector.broadcast %110 : f32 to vector<14x14xf32>
    %112 = arith.mulf %111, %28 : vector<14x14xf32>
    %113 = arith.addf %109, %112 : vector<14x14xf32>
    %c0_22 = arith.constant 0 : index
    %c17 = arith.constant 17 : index
    %114 = memref.load %arg2[%c0_22, %c17] : memref<6x27xf32, #tpu.memory_space<smem>>
    %115 = vector.broadcast %114 : f32 to vector<14x14xf32>
    %116 = arith.mulf %115, %29 : vector<14x14xf32>
    %117 = arith.addf %113, %116 : vector<14x14xf32>
    %c0_23 = arith.constant 0 : index
    %c18 = arith.constant 18 : index
    %118 = memref.load %arg2[%c0_23, %c18] : memref<6x27xf32, #tpu.memory_space<smem>>
    %119 = vector.broadcast %118 : f32 to vector<14x14xf32>
    %120 = arith.mulf %119, %33 : vector<14x14xf32>
    %121 = arith.addf %117, %120 : vector<14x14xf32>
    %c0_24 = arith.constant 0 : index
    %c19 = arith.constant 19 : index
    %122 = memref.load %arg2[%c0_24, %c19] : memref<6x27xf32, #tpu.memory_space<smem>>
    %123 = vector.broadcast %122 : f32 to vector<14x14xf32>
    %124 = arith.mulf %123, %34 : vector<14x14xf32>
    %125 = arith.addf %121, %124 : vector<14x14xf32>
    %c0_25 = arith.constant 0 : index
    %c20 = arith.constant 20 : index
    %126 = memref.load %arg2[%c0_25, %c20] : memref<6x27xf32, #tpu.memory_space<smem>>
    %127 = vector.broadcast %126 : f32 to vector<14x14xf32>
    %128 = arith.mulf %127, %35 : vector<14x14xf32>
    %129 = arith.addf %125, %128 : vector<14x14xf32>
    %c0_26 = arith.constant 0 : index
    %c21 = arith.constant 21 : index
    %130 = memref.load %arg2[%c0_26, %c21] : memref<6x27xf32, #tpu.memory_space<smem>>
    %131 = vector.broadcast %130 : f32 to vector<14x14xf32>
    %132 = arith.mulf %131, %37 : vector<14x14xf32>
    %133 = arith.addf %129, %132 : vector<14x14xf32>
    %c0_27 = arith.constant 0 : index
    %c22 = arith.constant 22 : index
    %134 = memref.load %arg2[%c0_27, %c22] : memref<6x27xf32, #tpu.memory_space<smem>>
    %135 = vector.broadcast %134 : f32 to vector<14x14xf32>
    %136 = arith.mulf %135, %38 : vector<14x14xf32>
    %137 = arith.addf %133, %136 : vector<14x14xf32>
    %c0_28 = arith.constant 0 : index
    %c23 = arith.constant 23 : index
    %138 = memref.load %arg2[%c0_28, %c23] : memref<6x27xf32, #tpu.memory_space<smem>>
    %139 = vector.broadcast %138 : f32 to vector<14x14xf32>
    %140 = arith.mulf %139, %39 : vector<14x14xf32>
    %141 = arith.addf %137, %140 : vector<14x14xf32>
    %c0_29 = arith.constant 0 : index
    %c24 = arith.constant 24 : index
    %142 = memref.load %arg2[%c0_29, %c24] : memref<6x27xf32, #tpu.memory_space<smem>>
    %143 = vector.broadcast %142 : f32 to vector<14x14xf32>
    %144 = arith.mulf %143, %41 : vector<14x14xf32>
    %145 = arith.addf %141, %144 : vector<14x14xf32>
    %c0_30 = arith.constant 0 : index
    %c25 = arith.constant 25 : index
    %146 = memref.load %arg2[%c0_30, %c25] : memref<6x27xf32, #tpu.memory_space<smem>>
    %147 = vector.broadcast %146 : f32 to vector<14x14xf32>
    %148 = arith.mulf %147, %42 : vector<14x14xf32>
    %149 = arith.addf %145, %148 : vector<14x14xf32>
    %c0_31 = arith.constant 0 : index
    %c26 = arith.constant 26 : index
    %150 = memref.load %arg2[%c0_31, %c26] : memref<6x27xf32, #tpu.memory_space<smem>>
    %151 = vector.broadcast %150 : f32 to vector<14x14xf32>
    %152 = arith.mulf %151, %43 : vector<14x14xf32>
    %153 = arith.addf %149, %152 : vector<14x14xf32>
    %c1_32 = arith.constant 1 : index
    %154 = memref.load %arg3[%c1_32] : memref<6xf32, #tpu.memory_space<smem>>
    %155 = vector.broadcast %154 : f32 to vector<14x14xf32>
    %c1_33 = arith.constant 1 : index
    %c0_34 = arith.constant 0 : index
    %156 = memref.load %arg2[%c1_33, %c0_34] : memref<6x27xf32, #tpu.memory_space<smem>>
    %157 = vector.broadcast %156 : f32 to vector<14x14xf32>
    %158 = arith.mulf %157, %5 : vector<14x14xf32>
    %159 = arith.addf %155, %158 : vector<14x14xf32>
    %c1_35 = arith.constant 1 : index
    %c1_36 = arith.constant 1 : index
    %160 = memref.load %arg2[%c1_35, %c1_36] : memref<6x27xf32, #tpu.memory_space<smem>>
    %161 = vector.broadcast %160 : f32 to vector<14x14xf32>
    %162 = arith.mulf %161, %6 : vector<14x14xf32>
    %163 = arith.addf %159, %162 : vector<14x14xf32>
    %c1_37 = arith.constant 1 : index
    %c2_38 = arith.constant 2 : index
    %164 = memref.load %arg2[%c1_37, %c2_38] : memref<6x27xf32, #tpu.memory_space<smem>>
    %165 = vector.broadcast %164 : f32 to vector<14x14xf32>
    %166 = arith.mulf %165, %7 : vector<14x14xf32>
    %167 = arith.addf %163, %166 : vector<14x14xf32>
    %c1_39 = arith.constant 1 : index
    %c3_40 = arith.constant 3 : index
    %168 = memref.load %arg2[%c1_39, %c3_40] : memref<6x27xf32, #tpu.memory_space<smem>>
    %169 = vector.broadcast %168 : f32 to vector<14x14xf32>
    %170 = arith.mulf %169, %9 : vector<14x14xf32>
    %171 = arith.addf %167, %170 : vector<14x14xf32>
    %c1_41 = arith.constant 1 : index
    %c4_42 = arith.constant 4 : index
    %172 = memref.load %arg2[%c1_41, %c4_42] : memref<6x27xf32, #tpu.memory_space<smem>>
    %173 = vector.broadcast %172 : f32 to vector<14x14xf32>
    %174 = arith.mulf %173, %10 : vector<14x14xf32>
    %175 = arith.addf %171, %174 : vector<14x14xf32>
    %c1_43 = arith.constant 1 : index
    %c5_44 = arith.constant 5 : index
    %176 = memref.load %arg2[%c1_43, %c5_44] : memref<6x27xf32, #tpu.memory_space<smem>>
    %177 = vector.broadcast %176 : f32 to vector<14x14xf32>
    %178 = arith.mulf %177, %11 : vector<14x14xf32>
    %179 = arith.addf %175, %178 : vector<14x14xf32>
    %c1_45 = arith.constant 1 : index
    %c6_46 = arith.constant 6 : index
    %180 = memref.load %arg2[%c1_45, %c6_46] : memref<6x27xf32, #tpu.memory_space<smem>>
    %181 = vector.broadcast %180 : f32 to vector<14x14xf32>
    %182 = arith.mulf %181, %13 : vector<14x14xf32>
    %183 = arith.addf %179, %182 : vector<14x14xf32>
    %c1_47 = arith.constant 1 : index
    %c7_48 = arith.constant 7 : index
    %184 = memref.load %arg2[%c1_47, %c7_48] : memref<6x27xf32, #tpu.memory_space<smem>>
    %185 = vector.broadcast %184 : f32 to vector<14x14xf32>
    %186 = arith.mulf %185, %14 : vector<14x14xf32>
    %187 = arith.addf %183, %186 : vector<14x14xf32>
    %c1_49 = arith.constant 1 : index
    %c8_50 = arith.constant 8 : index
    %188 = memref.load %arg2[%c1_49, %c8_50] : memref<6x27xf32, #tpu.memory_space<smem>>
    %189 = vector.broadcast %188 : f32 to vector<14x14xf32>
    %190 = arith.mulf %189, %15 : vector<14x14xf32>
    %191 = arith.addf %187, %190 : vector<14x14xf32>
    %c1_51 = arith.constant 1 : index
    %c9_52 = arith.constant 9 : index
    %192 = memref.load %arg2[%c1_51, %c9_52] : memref<6x27xf32, #tpu.memory_space<smem>>
    %193 = vector.broadcast %192 : f32 to vector<14x14xf32>
    %194 = arith.mulf %193, %19 : vector<14x14xf32>
    %195 = arith.addf %191, %194 : vector<14x14xf32>
    %c1_53 = arith.constant 1 : index
    %c10_54 = arith.constant 10 : index
    %196 = memref.load %arg2[%c1_53, %c10_54] : memref<6x27xf32, #tpu.memory_space<smem>>
    %197 = vector.broadcast %196 : f32 to vector<14x14xf32>
    %198 = arith.mulf %197, %20 : vector<14x14xf32>
    %199 = arith.addf %195, %198 : vector<14x14xf32>
    %c1_55 = arith.constant 1 : index
    %c11_56 = arith.constant 11 : index
    %200 = memref.load %arg2[%c1_55, %c11_56] : memref<6x27xf32, #tpu.memory_space<smem>>
    %201 = vector.broadcast %200 : f32 to vector<14x14xf32>
    %202 = arith.mulf %201, %21 : vector<14x14xf32>
    %203 = arith.addf %199, %202 : vector<14x14xf32>
    %c1_57 = arith.constant 1 : index
    %c12_58 = arith.constant 12 : index
    %204 = memref.load %arg2[%c1_57, %c12_58] : memref<6x27xf32, #tpu.memory_space<smem>>
    %205 = vector.broadcast %204 : f32 to vector<14x14xf32>
    %206 = arith.mulf %205, %23 : vector<14x14xf32>
    %207 = arith.addf %203, %206 : vector<14x14xf32>
    %c1_59 = arith.constant 1 : index
    %c13_60 = arith.constant 13 : index
    %208 = memref.load %arg2[%c1_59, %c13_60] : memref<6x27xf32, #tpu.memory_space<smem>>
    %209 = vector.broadcast %208 : f32 to vector<14x14xf32>
    %210 = arith.mulf %209, %24 : vector<14x14xf32>
    %211 = arith.addf %207, %210 : vector<14x14xf32>
    %c1_61 = arith.constant 1 : index
    %c14_62 = arith.constant 14 : index
    %212 = memref.load %arg2[%c1_61, %c14_62] : memref<6x27xf32, #tpu.memory_space<smem>>
    %213 = vector.broadcast %212 : f32 to vector<14x14xf32>
    %214 = arith.mulf %213, %25 : vector<14x14xf32>
    %215 = arith.addf %211, %214 : vector<14x14xf32>
    %c1_63 = arith.constant 1 : index
    %c15_64 = arith.constant 15 : index
    %216 = memref.load %arg2[%c1_63, %c15_64] : memref<6x27xf32, #tpu.memory_space<smem>>
    %217 = vector.broadcast %216 : f32 to vector<14x14xf32>
    %218 = arith.mulf %217, %27 : vector<14x14xf32>
    %219 = arith.addf %215, %218 : vector<14x14xf32>
    %c1_65 = arith.constant 1 : index
    %c16_66 = arith.constant 16 : index
    %220 = memref.load %arg2[%c1_65, %c16_66] : memref<6x27xf32, #tpu.memory_space<smem>>
    %221 = vector.broadcast %220 : f32 to vector<14x14xf32>
    %222 = arith.mulf %221, %28 : vector<14x14xf32>
    %223 = arith.addf %219, %222 : vector<14x14xf32>
    %c1_67 = arith.constant 1 : index
    %c17_68 = arith.constant 17 : index
    %224 = memref.load %arg2[%c1_67, %c17_68] : memref<6x27xf32, #tpu.memory_space<smem>>
    %225 = vector.broadcast %224 : f32 to vector<14x14xf32>
    %226 = arith.mulf %225, %29 : vector<14x14xf32>
    %227 = arith.addf %223, %226 : vector<14x14xf32>
    %c1_69 = arith.constant 1 : index
    %c18_70 = arith.constant 18 : index
    %228 = memref.load %arg2[%c1_69, %c18_70] : memref<6x27xf32, #tpu.memory_space<smem>>
    %229 = vector.broadcast %228 : f32 to vector<14x14xf32>
    %230 = arith.mulf %229, %33 : vector<14x14xf32>
    %231 = arith.addf %227, %230 : vector<14x14xf32>
    %c1_71 = arith.constant 1 : index
    %c19_72 = arith.constant 19 : index
    %232 = memref.load %arg2[%c1_71, %c19_72] : memref<6x27xf32, #tpu.memory_space<smem>>
    %233 = vector.broadcast %232 : f32 to vector<14x14xf32>
    %234 = arith.mulf %233, %34 : vector<14x14xf32>
    %235 = arith.addf %231, %234 : vector<14x14xf32>
    %c1_73 = arith.constant 1 : index
    %c20_74 = arith.constant 20 : index
    %236 = memref.load %arg2[%c1_73, %c20_74] : memref<6x27xf32, #tpu.memory_space<smem>>
    %237 = vector.broadcast %236 : f32 to vector<14x14xf32>
    %238 = arith.mulf %237, %35 : vector<14x14xf32>
    %239 = arith.addf %235, %238 : vector<14x14xf32>
    %c1_75 = arith.constant 1 : index
    %c21_76 = arith.constant 21 : index
    %240 = memref.load %arg2[%c1_75, %c21_76] : memref<6x27xf32, #tpu.memory_space<smem>>
    %241 = vector.broadcast %240 : f32 to vector<14x14xf32>
    %242 = arith.mulf %241, %37 : vector<14x14xf32>
    %243 = arith.addf %239, %242 : vector<14x14xf32>
    %c1_77 = arith.constant 1 : index
    %c22_78 = arith.constant 22 : index
    %244 = memref.load %arg2[%c1_77, %c22_78] : memref<6x27xf32, #tpu.memory_space<smem>>
    %245 = vector.broadcast %244 : f32 to vector<14x14xf32>
    %246 = arith.mulf %245, %38 : vector<14x14xf32>
    %247 = arith.addf %243, %246 : vector<14x14xf32>
    %c1_79 = arith.constant 1 : index
    %c23_80 = arith.constant 23 : index
    %248 = memref.load %arg2[%c1_79, %c23_80] : memref<6x27xf32, #tpu.memory_space<smem>>
    %249 = vector.broadcast %248 : f32 to vector<14x14xf32>
    %250 = arith.mulf %249, %39 : vector<14x14xf32>
    %251 = arith.addf %247, %250 : vector<14x14xf32>
    %c1_81 = arith.constant 1 : index
    %c24_82 = arith.constant 24 : index
    %252 = memref.load %arg2[%c1_81, %c24_82] : memref<6x27xf32, #tpu.memory_space<smem>>
    %253 = vector.broadcast %252 : f32 to vector<14x14xf32>
    %254 = arith.mulf %253, %41 : vector<14x14xf32>
    %255 = arith.addf %251, %254 : vector<14x14xf32>
    %c1_83 = arith.constant 1 : index
    %c25_84 = arith.constant 25 : index
    %256 = memref.load %arg2[%c1_83, %c25_84] : memref<6x27xf32, #tpu.memory_space<smem>>
    %257 = vector.broadcast %256 : f32 to vector<14x14xf32>
    %258 = arith.mulf %257, %42 : vector<14x14xf32>
    %259 = arith.addf %255, %258 : vector<14x14xf32>
    %c1_85 = arith.constant 1 : index
    %c26_86 = arith.constant 26 : index
    %260 = memref.load %arg2[%c1_85, %c26_86] : memref<6x27xf32, #tpu.memory_space<smem>>
    %261 = vector.broadcast %260 : f32 to vector<14x14xf32>
    %262 = arith.mulf %261, %43 : vector<14x14xf32>
    %263 = arith.addf %259, %262 : vector<14x14xf32>
    %c2_87 = arith.constant 2 : index
    %264 = memref.load %arg3[%c2_87] : memref<6xf32, #tpu.memory_space<smem>>
    %265 = vector.broadcast %264 : f32 to vector<14x14xf32>
    %c2_88 = arith.constant 2 : index
    %c0_89 = arith.constant 0 : index
    %266 = memref.load %arg2[%c2_88, %c0_89] : memref<6x27xf32, #tpu.memory_space<smem>>
    %267 = vector.broadcast %266 : f32 to vector<14x14xf32>
    %268 = arith.mulf %267, %5 : vector<14x14xf32>
    %269 = arith.addf %265, %268 : vector<14x14xf32>
    %c2_90 = arith.constant 2 : index
    %c1_91 = arith.constant 1 : index
    %270 = memref.load %arg2[%c2_90, %c1_91] : memref<6x27xf32, #tpu.memory_space<smem>>
    %271 = vector.broadcast %270 : f32 to vector<14x14xf32>
    %272 = arith.mulf %271, %6 : vector<14x14xf32>
    %273 = arith.addf %269, %272 : vector<14x14xf32>
    %c2_92 = arith.constant 2 : index
    %c2_93 = arith.constant 2 : index
    %274 = memref.load %arg2[%c2_92, %c2_93] : memref<6x27xf32, #tpu.memory_space<smem>>
    %275 = vector.broadcast %274 : f32 to vector<14x14xf32>
    %276 = arith.mulf %275, %7 : vector<14x14xf32>
    %277 = arith.addf %273, %276 : vector<14x14xf32>
    %c2_94 = arith.constant 2 : index
    %c3_95 = arith.constant 3 : index
    %278 = memref.load %arg2[%c2_94, %c3_95] : memref<6x27xf32, #tpu.memory_space<smem>>
    %279 = vector.broadcast %278 : f32 to vector<14x14xf32>
    %280 = arith.mulf %279, %9 : vector<14x14xf32>
    %281 = arith.addf %277, %280 : vector<14x14xf32>
    %c2_96 = arith.constant 2 : index
    %c4_97 = arith.constant 4 : index
    %282 = memref.load %arg2[%c2_96, %c4_97] : memref<6x27xf32, #tpu.memory_space<smem>>
    %283 = vector.broadcast %282 : f32 to vector<14x14xf32>
    %284 = arith.mulf %283, %10 : vector<14x14xf32>
    %285 = arith.addf %281, %284 : vector<14x14xf32>
    %c2_98 = arith.constant 2 : index
    %c5_99 = arith.constant 5 : index
    %286 = memref.load %arg2[%c2_98, %c5_99] : memref<6x27xf32, #tpu.memory_space<smem>>
    %287 = vector.broadcast %286 : f32 to vector<14x14xf32>
    %288 = arith.mulf %287, %11 : vector<14x14xf32>
    %289 = arith.addf %285, %288 : vector<14x14xf32>
    %c2_100 = arith.constant 2 : index
    %c6_101 = arith.constant 6 : index
    %290 = memref.load %arg2[%c2_100, %c6_101] : memref<6x27xf32, #tpu.memory_space<smem>>
    %291 = vector.broadcast %290 : f32 to vector<14x14xf32>
    %292 = arith.mulf %291, %13 : vector<14x14xf32>
    %293 = arith.addf %289, %292 : vector<14x14xf32>
    %c2_102 = arith.constant 2 : index
    %c7_103 = arith.constant 7 : index
    %294 = memref.load %arg2[%c2_102, %c7_103] : memref<6x27xf32, #tpu.memory_space<smem>>
    %295 = vector.broadcast %294 : f32 to vector<14x14xf32>
    %296 = arith.mulf %295, %14 : vector<14x14xf32>
    %297 = arith.addf %293, %296 : vector<14x14xf32>
    %c2_104 = arith.constant 2 : index
    %c8_105 = arith.constant 8 : index
    %298 = memref.load %arg2[%c2_104, %c8_105] : memref<6x27xf32, #tpu.memory_space<smem>>
    %299 = vector.broadcast %298 : f32 to vector<14x14xf32>
    %300 = arith.mulf %299, %15 : vector<14x14xf32>
    %301 = arith.addf %297, %300 : vector<14x14xf32>
    %c2_106 = arith.constant 2 : index
    %c9_107 = arith.constant 9 : index
    %302 = memref.load %arg2[%c2_106, %c9_107] : memref<6x27xf32, #tpu.memory_space<smem>>
    %303 = vector.broadcast %302 : f32 to vector<14x14xf32>
    %304 = arith.mulf %303, %19 : vector<14x14xf32>
    %305 = arith.addf %301, %304 : vector<14x14xf32>
    %c2_108 = arith.constant 2 : index
    %c10_109 = arith.constant 10 : index
    %306 = memref.load %arg2[%c2_108, %c10_109] : memref<6x27xf32, #tpu.memory_space<smem>>
    %307 = vector.broadcast %306 : f32 to vector<14x14xf32>
    %308 = arith.mulf %307, %20 : vector<14x14xf32>
    %309 = arith.addf %305, %308 : vector<14x14xf32>
    %c2_110 = arith.constant 2 : index
    %c11_111 = arith.constant 11 : index
    %310 = memref.load %arg2[%c2_110, %c11_111] : memref<6x27xf32, #tpu.memory_space<smem>>
    %311 = vector.broadcast %310 : f32 to vector<14x14xf32>
    %312 = arith.mulf %311, %21 : vector<14x14xf32>
    %313 = arith.addf %309, %312 : vector<14x14xf32>
    %c2_112 = arith.constant 2 : index
    %c12_113 = arith.constant 12 : index
    %314 = memref.load %arg2[%c2_112, %c12_113] : memref<6x27xf32, #tpu.memory_space<smem>>
    %315 = vector.broadcast %314 : f32 to vector<14x14xf32>
    %316 = arith.mulf %315, %23 : vector<14x14xf32>
    %317 = arith.addf %313, %316 : vector<14x14xf32>
    %c2_114 = arith.constant 2 : index
    %c13_115 = arith.constant 13 : index
    %318 = memref.load %arg2[%c2_114, %c13_115] : memref<6x27xf32, #tpu.memory_space<smem>>
    %319 = vector.broadcast %318 : f32 to vector<14x14xf32>
    %320 = arith.mulf %319, %24 : vector<14x14xf32>
    %321 = arith.addf %317, %320 : vector<14x14xf32>
    %c2_116 = arith.constant 2 : index
    %c14_117 = arith.constant 14 : index
    %322 = memref.load %arg2[%c2_116, %c14_117] : memref<6x27xf32, #tpu.memory_space<smem>>
    %323 = vector.broadcast %322 : f32 to vector<14x14xf32>
    %324 = arith.mulf %323, %25 : vector<14x14xf32>
    %325 = arith.addf %321, %324 : vector<14x14xf32>
    %c2_118 = arith.constant 2 : index
    %c15_119 = arith.constant 15 : index
    %326 = memref.load %arg2[%c2_118, %c15_119] : memref<6x27xf32, #tpu.memory_space<smem>>
    %327 = vector.broadcast %326 : f32 to vector<14x14xf32>
    %328 = arith.mulf %327, %27 : vector<14x14xf32>
    %329 = arith.addf %325, %328 : vector<14x14xf32>
    %c2_120 = arith.constant 2 : index
    %c16_121 = arith.constant 16 : index
    %330 = memref.load %arg2[%c2_120, %c16_121] : memref<6x27xf32, #tpu.memory_space<smem>>
    %331 = vector.broadcast %330 : f32 to vector<14x14xf32>
    %332 = arith.mulf %331, %28 : vector<14x14xf32>
    %333 = arith.addf %329, %332 : vector<14x14xf32>
    %c2_122 = arith.constant 2 : index
    %c17_123 = arith.constant 17 : index
    %334 = memref.load %arg2[%c2_122, %c17_123] : memref<6x27xf32, #tpu.memory_space<smem>>
    %335 = vector.broadcast %334 : f32 to vector<14x14xf32>
    %336 = arith.mulf %335, %29 : vector<14x14xf32>
    %337 = arith.addf %333, %336 : vector<14x14xf32>
    %c2_124 = arith.constant 2 : index
    %c18_125 = arith.constant 18 : index
    %338 = memref.load %arg2[%c2_124, %c18_125] : memref<6x27xf32, #tpu.memory_space<smem>>
    %339 = vector.broadcast %338 : f32 to vector<14x14xf32>
    %340 = arith.mulf %339, %33 : vector<14x14xf32>
    %341 = arith.addf %337, %340 : vector<14x14xf32>
    %c2_126 = arith.constant 2 : index
    %c19_127 = arith.constant 19 : index
    %342 = memref.load %arg2[%c2_126, %c19_127] : memref<6x27xf32, #tpu.memory_space<smem>>
    %343 = vector.broadcast %342 : f32 to vector<14x14xf32>
    %344 = arith.mulf %343, %34 : vector<14x14xf32>
    %345 = arith.addf %341, %344 : vector<14x14xf32>
    %c2_128 = arith.constant 2 : index
    %c20_129 = arith.constant 20 : index
    %346 = memref.load %arg2[%c2_128, %c20_129] : memref<6x27xf32, #tpu.memory_space<smem>>
    %347 = vector.broadcast %346 : f32 to vector<14x14xf32>
    %348 = arith.mulf %347, %35 : vector<14x14xf32>
    %349 = arith.addf %345, %348 : vector<14x14xf32>
    %c2_130 = arith.constant 2 : index
    %c21_131 = arith.constant 21 : index
    %350 = memref.load %arg2[%c2_130, %c21_131] : memref<6x27xf32, #tpu.memory_space<smem>>
    %351 = vector.broadcast %350 : f32 to vector<14x14xf32>
    %352 = arith.mulf %351, %37 : vector<14x14xf32>
    %353 = arith.addf %349, %352 : vector<14x14xf32>
    %c2_132 = arith.constant 2 : index
    %c22_133 = arith.constant 22 : index
    %354 = memref.load %arg2[%c2_132, %c22_133] : memref<6x27xf32, #tpu.memory_space<smem>>
    %355 = vector.broadcast %354 : f32 to vector<14x14xf32>
    %356 = arith.mulf %355, %38 : vector<14x14xf32>
    %357 = arith.addf %353, %356 : vector<14x14xf32>
    %c2_134 = arith.constant 2 : index
    %c23_135 = arith.constant 23 : index
    %358 = memref.load %arg2[%c2_134, %c23_135] : memref<6x27xf32, #tpu.memory_space<smem>>
    %359 = vector.broadcast %358 : f32 to vector<14x14xf32>
    %360 = arith.mulf %359, %39 : vector<14x14xf32>
    %361 = arith.addf %357, %360 : vector<14x14xf32>
    %c2_136 = arith.constant 2 : index
    %c24_137 = arith.constant 24 : index
    %362 = memref.load %arg2[%c2_136, %c24_137] : memref<6x27xf32, #tpu.memory_space<smem>>
    %363 = vector.broadcast %362 : f32 to vector<14x14xf32>
    %364 = arith.mulf %363, %41 : vector<14x14xf32>
    %365 = arith.addf %361, %364 : vector<14x14xf32>
    %c2_138 = arith.constant 2 : index
    %c25_139 = arith.constant 25 : index
    %366 = memref.load %arg2[%c2_138, %c25_139] : memref<6x27xf32, #tpu.memory_space<smem>>
    %367 = vector.broadcast %366 : f32 to vector<14x14xf32>
    %368 = arith.mulf %367, %42 : vector<14x14xf32>
    %369 = arith.addf %365, %368 : vector<14x14xf32>
    %c2_140 = arith.constant 2 : index
    %c26_141 = arith.constant 26 : index
    %370 = memref.load %arg2[%c2_140, %c26_141] : memref<6x27xf32, #tpu.memory_space<smem>>
    %371 = vector.broadcast %370 : f32 to vector<14x14xf32>
    %372 = arith.mulf %371, %43 : vector<14x14xf32>
    %373 = arith.addf %369, %372 : vector<14x14xf32>
    %c3_142 = arith.constant 3 : index
    %374 = memref.load %arg3[%c3_142] : memref<6xf32, #tpu.memory_space<smem>>
    %375 = vector.broadcast %374 : f32 to vector<14x14xf32>
    %c3_143 = arith.constant 3 : index
    %c0_144 = arith.constant 0 : index
    %376 = memref.load %arg2[%c3_143, %c0_144] : memref<6x27xf32, #tpu.memory_space<smem>>
    %377 = vector.broadcast %376 : f32 to vector<14x14xf32>
    %378 = arith.mulf %377, %5 : vector<14x14xf32>
    %379 = arith.addf %375, %378 : vector<14x14xf32>
    %c3_145 = arith.constant 3 : index
    %c1_146 = arith.constant 1 : index
    %380 = memref.load %arg2[%c3_145, %c1_146] : memref<6x27xf32, #tpu.memory_space<smem>>
    %381 = vector.broadcast %380 : f32 to vector<14x14xf32>
    %382 = arith.mulf %381, %6 : vector<14x14xf32>
    %383 = arith.addf %379, %382 : vector<14x14xf32>
    %c3_147 = arith.constant 3 : index
    %c2_148 = arith.constant 2 : index
    %384 = memref.load %arg2[%c3_147, %c2_148] : memref<6x27xf32, #tpu.memory_space<smem>>
    %385 = vector.broadcast %384 : f32 to vector<14x14xf32>
    %386 = arith.mulf %385, %7 : vector<14x14xf32>
    %387 = arith.addf %383, %386 : vector<14x14xf32>
    %c3_149 = arith.constant 3 : index
    %c3_150 = arith.constant 3 : index
    %388 = memref.load %arg2[%c3_149, %c3_150] : memref<6x27xf32, #tpu.memory_space<smem>>
    %389 = vector.broadcast %388 : f32 to vector<14x14xf32>
    %390 = arith.mulf %389, %9 : vector<14x14xf32>
    %391 = arith.addf %387, %390 : vector<14x14xf32>
    %c3_151 = arith.constant 3 : index
    %c4_152 = arith.constant 4 : index
    %392 = memref.load %arg2[%c3_151, %c4_152] : memref<6x27xf32, #tpu.memory_space<smem>>
    %393 = vector.broadcast %392 : f32 to vector<14x14xf32>
    %394 = arith.mulf %393, %10 : vector<14x14xf32>
    %395 = arith.addf %391, %394 : vector<14x14xf32>
    %c3_153 = arith.constant 3 : index
    %c5_154 = arith.constant 5 : index
    %396 = memref.load %arg2[%c3_153, %c5_154] : memref<6x27xf32, #tpu.memory_space<smem>>
    %397 = vector.broadcast %396 : f32 to vector<14x14xf32>
    %398 = arith.mulf %397, %11 : vector<14x14xf32>
    %399 = arith.addf %395, %398 : vector<14x14xf32>
    %c3_155 = arith.constant 3 : index
    %c6_156 = arith.constant 6 : index
    %400 = memref.load %arg2[%c3_155, %c6_156] : memref<6x27xf32, #tpu.memory_space<smem>>
    %401 = vector.broadcast %400 : f32 to vector<14x14xf32>
    %402 = arith.mulf %401, %13 : vector<14x14xf32>
    %403 = arith.addf %399, %402 : vector<14x14xf32>
    %c3_157 = arith.constant 3 : index
    %c7_158 = arith.constant 7 : index
    %404 = memref.load %arg2[%c3_157, %c7_158] : memref<6x27xf32, #tpu.memory_space<smem>>
    %405 = vector.broadcast %404 : f32 to vector<14x14xf32>
    %406 = arith.mulf %405, %14 : vector<14x14xf32>
    %407 = arith.addf %403, %406 : vector<14x14xf32>
    %c3_159 = arith.constant 3 : index
    %c8_160 = arith.constant 8 : index
    %408 = memref.load %arg2[%c3_159, %c8_160] : memref<6x27xf32, #tpu.memory_space<smem>>
    %409 = vector.broadcast %408 : f32 to vector<14x14xf32>
    %410 = arith.mulf %409, %15 : vector<14x14xf32>
    %411 = arith.addf %407, %410 : vector<14x14xf32>
    %c3_161 = arith.constant 3 : index
    %c9_162 = arith.constant 9 : index
    %412 = memref.load %arg2[%c3_161, %c9_162] : memref<6x27xf32, #tpu.memory_space<smem>>
    %413 = vector.broadcast %412 : f32 to vector<14x14xf32>
    %414 = arith.mulf %413, %19 : vector<14x14xf32>
    %415 = arith.addf %411, %414 : vector<14x14xf32>
    %c3_163 = arith.constant 3 : index
    %c10_164 = arith.constant 10 : index
    %416 = memref.load %arg2[%c3_163, %c10_164] : memref<6x27xf32, #tpu.memory_space<smem>>
    %417 = vector.broadcast %416 : f32 to vector<14x14xf32>
    %418 = arith.mulf %417, %20 : vector<14x14xf32>
    %419 = arith.addf %415, %418 : vector<14x14xf32>
    %c3_165 = arith.constant 3 : index
    %c11_166 = arith.constant 11 : index
    %420 = memref.load %arg2[%c3_165, %c11_166] : memref<6x27xf32, #tpu.memory_space<smem>>
    %421 = vector.broadcast %420 : f32 to vector<14x14xf32>
    %422 = arith.mulf %421, %21 : vector<14x14xf32>
    %423 = arith.addf %419, %422 : vector<14x14xf32>
    %c3_167 = arith.constant 3 : index
    %c12_168 = arith.constant 12 : index
    %424 = memref.load %arg2[%c3_167, %c12_168] : memref<6x27xf32, #tpu.memory_space<smem>>
    %425 = vector.broadcast %424 : f32 to vector<14x14xf32>
    %426 = arith.mulf %425, %23 : vector<14x14xf32>
    %427 = arith.addf %423, %426 : vector<14x14xf32>
    %c3_169 = arith.constant 3 : index
    %c13_170 = arith.constant 13 : index
    %428 = memref.load %arg2[%c3_169, %c13_170] : memref<6x27xf32, #tpu.memory_space<smem>>
    %429 = vector.broadcast %428 : f32 to vector<14x14xf32>
    %430 = arith.mulf %429, %24 : vector<14x14xf32>
    %431 = arith.addf %427, %430 : vector<14x14xf32>
    %c3_171 = arith.constant 3 : index
    %c14_172 = arith.constant 14 : index
    %432 = memref.load %arg2[%c3_171, %c14_172] : memref<6x27xf32, #tpu.memory_space<smem>>
    %433 = vector.broadcast %432 : f32 to vector<14x14xf32>
    %434 = arith.mulf %433, %25 : vector<14x14xf32>
    %435 = arith.addf %431, %434 : vector<14x14xf32>
    %c3_173 = arith.constant 3 : index
    %c15_174 = arith.constant 15 : index
    %436 = memref.load %arg2[%c3_173, %c15_174] : memref<6x27xf32, #tpu.memory_space<smem>>
    %437 = vector.broadcast %436 : f32 to vector<14x14xf32>
    %438 = arith.mulf %437, %27 : vector<14x14xf32>
    %439 = arith.addf %435, %438 : vector<14x14xf32>
    %c3_175 = arith.constant 3 : index
    %c16_176 = arith.constant 16 : index
    %440 = memref.load %arg2[%c3_175, %c16_176] : memref<6x27xf32, #tpu.memory_space<smem>>
    %441 = vector.broadcast %440 : f32 to vector<14x14xf32>
    %442 = arith.mulf %441, %28 : vector<14x14xf32>
    %443 = arith.addf %439, %442 : vector<14x14xf32>
    %c3_177 = arith.constant 3 : index
    %c17_178 = arith.constant 17 : index
    %444 = memref.load %arg2[%c3_177, %c17_178] : memref<6x27xf32, #tpu.memory_space<smem>>
    %445 = vector.broadcast %444 : f32 to vector<14x14xf32>
    %446 = arith.mulf %445, %29 : vector<14x14xf32>
    %447 = arith.addf %443, %446 : vector<14x14xf32>
    %c3_179 = arith.constant 3 : index
    %c18_180 = arith.constant 18 : index
    %448 = memref.load %arg2[%c3_179, %c18_180] : memref<6x27xf32, #tpu.memory_space<smem>>
    %449 = vector.broadcast %448 : f32 to vector<14x14xf32>
    %450 = arith.mulf %449, %33 : vector<14x14xf32>
    %451 = arith.addf %447, %450 : vector<14x14xf32>
    %c3_181 = arith.constant 3 : index
    %c19_182 = arith.constant 19 : index
    %452 = memref.load %arg2[%c3_181, %c19_182] : memref<6x27xf32, #tpu.memory_space<smem>>
    %453 = vector.broadcast %452 : f32 to vector<14x14xf32>
    %454 = arith.mulf %453, %34 : vector<14x14xf32>
    %455 = arith.addf %451, %454 : vector<14x14xf32>
    %c3_183 = arith.constant 3 : index
    %c20_184 = arith.constant 20 : index
    %456 = memref.load %arg2[%c3_183, %c20_184] : memref<6x27xf32, #tpu.memory_space<smem>>
    %457 = vector.broadcast %456 : f32 to vector<14x14xf32>
    %458 = arith.mulf %457, %35 : vector<14x14xf32>
    %459 = arith.addf %455, %458 : vector<14x14xf32>
    %c3_185 = arith.constant 3 : index
    %c21_186 = arith.constant 21 : index
    %460 = memref.load %arg2[%c3_185, %c21_186] : memref<6x27xf32, #tpu.memory_space<smem>>
    %461 = vector.broadcast %460 : f32 to vector<14x14xf32>
    %462 = arith.mulf %461, %37 : vector<14x14xf32>
    %463 = arith.addf %459, %462 : vector<14x14xf32>
    %c3_187 = arith.constant 3 : index
    %c22_188 = arith.constant 22 : index
    %464 = memref.load %arg2[%c3_187, %c22_188] : memref<6x27xf32, #tpu.memory_space<smem>>
    %465 = vector.broadcast %464 : f32 to vector<14x14xf32>
    %466 = arith.mulf %465, %38 : vector<14x14xf32>
    %467 = arith.addf %463, %466 : vector<14x14xf32>
    %c3_189 = arith.constant 3 : index
    %c23_190 = arith.constant 23 : index
    %468 = memref.load %arg2[%c3_189, %c23_190] : memref<6x27xf32, #tpu.memory_space<smem>>
    %469 = vector.broadcast %468 : f32 to vector<14x14xf32>
    %470 = arith.mulf %469, %39 : vector<14x14xf32>
    %471 = arith.addf %467, %470 : vector<14x14xf32>
    %c3_191 = arith.constant 3 : index
    %c24_192 = arith.constant 24 : index
    %472 = memref.load %arg2[%c3_191, %c24_192] : memref<6x27xf32, #tpu.memory_space<smem>>
    %473 = vector.broadcast %472 : f32 to vector<14x14xf32>
    %474 = arith.mulf %473, %41 : vector<14x14xf32>
    %475 = arith.addf %471, %474 : vector<14x14xf32>
    %c3_193 = arith.constant 3 : index
    %c25_194 = arith.constant 25 : index
    %476 = memref.load %arg2[%c3_193, %c25_194] : memref<6x27xf32, #tpu.memory_space<smem>>
    %477 = vector.broadcast %476 : f32 to vector<14x14xf32>
    %478 = arith.mulf %477, %42 : vector<14x14xf32>
    %479 = arith.addf %475, %478 : vector<14x14xf32>
    %c3_195 = arith.constant 3 : index
    %c26_196 = arith.constant 26 : index
    %480 = memref.load %arg2[%c3_195, %c26_196] : memref<6x27xf32, #tpu.memory_space<smem>>
    %481 = vector.broadcast %480 : f32 to vector<14x14xf32>
    %482 = arith.mulf %481, %43 : vector<14x14xf32>
    %483 = arith.addf %479, %482 : vector<14x14xf32>
    %c4_197 = arith.constant 4 : index
    %484 = memref.load %arg3[%c4_197] : memref<6xf32, #tpu.memory_space<smem>>
    %485 = vector.broadcast %484 : f32 to vector<14x14xf32>
    %c4_198 = arith.constant 4 : index
    %c0_199 = arith.constant 0 : index
    %486 = memref.load %arg2[%c4_198, %c0_199] : memref<6x27xf32, #tpu.memory_space<smem>>
    %487 = vector.broadcast %486 : f32 to vector<14x14xf32>
    %488 = arith.mulf %487, %5 : vector<14x14xf32>
    %489 = arith.addf %485, %488 : vector<14x14xf32>
    %c4_200 = arith.constant 4 : index
    %c1_201 = arith.constant 1 : index
    %490 = memref.load %arg2[%c4_200, %c1_201] : memref<6x27xf32, #tpu.memory_space<smem>>
    %491 = vector.broadcast %490 : f32 to vector<14x14xf32>
    %492 = arith.mulf %491, %6 : vector<14x14xf32>
    %493 = arith.addf %489, %492 : vector<14x14xf32>
    %c4_202 = arith.constant 4 : index
    %c2_203 = arith.constant 2 : index
    %494 = memref.load %arg2[%c4_202, %c2_203] : memref<6x27xf32, #tpu.memory_space<smem>>
    %495 = vector.broadcast %494 : f32 to vector<14x14xf32>
    %496 = arith.mulf %495, %7 : vector<14x14xf32>
    %497 = arith.addf %493, %496 : vector<14x14xf32>
    %c4_204 = arith.constant 4 : index
    %c3_205 = arith.constant 3 : index
    %498 = memref.load %arg2[%c4_204, %c3_205] : memref<6x27xf32, #tpu.memory_space<smem>>
    %499 = vector.broadcast %498 : f32 to vector<14x14xf32>
    %500 = arith.mulf %499, %9 : vector<14x14xf32>
    %501 = arith.addf %497, %500 : vector<14x14xf32>
    %c4_206 = arith.constant 4 : index
    %c4_207 = arith.constant 4 : index
    %502 = memref.load %arg2[%c4_206, %c4_207] : memref<6x27xf32, #tpu.memory_space<smem>>
    %503 = vector.broadcast %502 : f32 to vector<14x14xf32>
    %504 = arith.mulf %503, %10 : vector<14x14xf32>
    %505 = arith.addf %501, %504 : vector<14x14xf32>
    %c4_208 = arith.constant 4 : index
    %c5_209 = arith.constant 5 : index
    %506 = memref.load %arg2[%c4_208, %c5_209] : memref<6x27xf32, #tpu.memory_space<smem>>
    %507 = vector.broadcast %506 : f32 to vector<14x14xf32>
    %508 = arith.mulf %507, %11 : vector<14x14xf32>
    %509 = arith.addf %505, %508 : vector<14x14xf32>
    %c4_210 = arith.constant 4 : index
    %c6_211 = arith.constant 6 : index
    %510 = memref.load %arg2[%c4_210, %c6_211] : memref<6x27xf32, #tpu.memory_space<smem>>
    %511 = vector.broadcast %510 : f32 to vector<14x14xf32>
    %512 = arith.mulf %511, %13 : vector<14x14xf32>
    %513 = arith.addf %509, %512 : vector<14x14xf32>
    %c4_212 = arith.constant 4 : index
    %c7_213 = arith.constant 7 : index
    %514 = memref.load %arg2[%c4_212, %c7_213] : memref<6x27xf32, #tpu.memory_space<smem>>
    %515 = vector.broadcast %514 : f32 to vector<14x14xf32>
    %516 = arith.mulf %515, %14 : vector<14x14xf32>
    %517 = arith.addf %513, %516 : vector<14x14xf32>
    %c4_214 = arith.constant 4 : index
    %c8_215 = arith.constant 8 : index
    %518 = memref.load %arg2[%c4_214, %c8_215] : memref<6x27xf32, #tpu.memory_space<smem>>
    %519 = vector.broadcast %518 : f32 to vector<14x14xf32>
    %520 = arith.mulf %519, %15 : vector<14x14xf32>
    %521 = arith.addf %517, %520 : vector<14x14xf32>
    %c4_216 = arith.constant 4 : index
    %c9_217 = arith.constant 9 : index
    %522 = memref.load %arg2[%c4_216, %c9_217] : memref<6x27xf32, #tpu.memory_space<smem>>
    %523 = vector.broadcast %522 : f32 to vector<14x14xf32>
    %524 = arith.mulf %523, %19 : vector<14x14xf32>
    %525 = arith.addf %521, %524 : vector<14x14xf32>
    %c4_218 = arith.constant 4 : index
    %c10_219 = arith.constant 10 : index
    %526 = memref.load %arg2[%c4_218, %c10_219] : memref<6x27xf32, #tpu.memory_space<smem>>
    %527 = vector.broadcast %526 : f32 to vector<14x14xf32>
    %528 = arith.mulf %527, %20 : vector<14x14xf32>
    %529 = arith.addf %525, %528 : vector<14x14xf32>
    %c4_220 = arith.constant 4 : index
    %c11_221 = arith.constant 11 : index
    %530 = memref.load %arg2[%c4_220, %c11_221] : memref<6x27xf32, #tpu.memory_space<smem>>
    %531 = vector.broadcast %530 : f32 to vector<14x14xf32>
    %532 = arith.mulf %531, %21 : vector<14x14xf32>
    %533 = arith.addf %529, %532 : vector<14x14xf32>
    %c4_222 = arith.constant 4 : index
    %c12_223 = arith.constant 12 : index
    %534 = memref.load %arg2[%c4_222, %c12_223] : memref<6x27xf32, #tpu.memory_space<smem>>
    %535 = vector.broadcast %534 : f32 to vector<14x14xf32>
    %536 = arith.mulf %535, %23 : vector<14x14xf32>
    %537 = arith.addf %533, %536 : vector<14x14xf32>
    %c4_224 = arith.constant 4 : index
    %c13_225 = arith.constant 13 : index
    %538 = memref.load %arg2[%c4_224, %c13_225] : memref<6x27xf32, #tpu.memory_space<smem>>
    %539 = vector.broadcast %538 : f32 to vector<14x14xf32>
    %540 = arith.mulf %539, %24 : vector<14x14xf32>
    %541 = arith.addf %537, %540 : vector<14x14xf32>
    %c4_226 = arith.constant 4 : index
    %c14_227 = arith.constant 14 : index
    %542 = memref.load %arg2[%c4_226, %c14_227] : memref<6x27xf32, #tpu.memory_space<smem>>
    %543 = vector.broadcast %542 : f32 to vector<14x14xf32>
    %544 = arith.mulf %543, %25 : vector<14x14xf32>
    %545 = arith.addf %541, %544 : vector<14x14xf32>
    %c4_228 = arith.constant 4 : index
    %c15_229 = arith.constant 15 : index
    %546 = memref.load %arg2[%c4_228, %c15_229] : memref<6x27xf32, #tpu.memory_space<smem>>
    %547 = vector.broadcast %546 : f32 to vector<14x14xf32>
    %548 = arith.mulf %547, %27 : vector<14x14xf32>
    %549 = arith.addf %545, %548 : vector<14x14xf32>
    %c4_230 = arith.constant 4 : index
    %c16_231 = arith.constant 16 : index
    %550 = memref.load %arg2[%c4_230, %c16_231] : memref<6x27xf32, #tpu.memory_space<smem>>
    %551 = vector.broadcast %550 : f32 to vector<14x14xf32>
    %552 = arith.mulf %551, %28 : vector<14x14xf32>
    %553 = arith.addf %549, %552 : vector<14x14xf32>
    %c4_232 = arith.constant 4 : index
    %c17_233 = arith.constant 17 : index
    %554 = memref.load %arg2[%c4_232, %c17_233] : memref<6x27xf32, #tpu.memory_space<smem>>
    %555 = vector.broadcast %554 : f32 to vector<14x14xf32>
    %556 = arith.mulf %555, %29 : vector<14x14xf32>
    %557 = arith.addf %553, %556 : vector<14x14xf32>
    %c4_234 = arith.constant 4 : index
    %c18_235 = arith.constant 18 : index
    %558 = memref.load %arg2[%c4_234, %c18_235] : memref<6x27xf32, #tpu.memory_space<smem>>
    %559 = vector.broadcast %558 : f32 to vector<14x14xf32>
    %560 = arith.mulf %559, %33 : vector<14x14xf32>
    %561 = arith.addf %557, %560 : vector<14x14xf32>
    %c4_236 = arith.constant 4 : index
    %c19_237 = arith.constant 19 : index
    %562 = memref.load %arg2[%c4_236, %c19_237] : memref<6x27xf32, #tpu.memory_space<smem>>
    %563 = vector.broadcast %562 : f32 to vector<14x14xf32>
    %564 = arith.mulf %563, %34 : vector<14x14xf32>
    %565 = arith.addf %561, %564 : vector<14x14xf32>
    %c4_238 = arith.constant 4 : index
    %c20_239 = arith.constant 20 : index
    %566 = memref.load %arg2[%c4_238, %c20_239] : memref<6x27xf32, #tpu.memory_space<smem>>
    %567 = vector.broadcast %566 : f32 to vector<14x14xf32>
    %568 = arith.mulf %567, %35 : vector<14x14xf32>
    %569 = arith.addf %565, %568 : vector<14x14xf32>
    %c4_240 = arith.constant 4 : index
    %c21_241 = arith.constant 21 : index
    %570 = memref.load %arg2[%c4_240, %c21_241] : memref<6x27xf32, #tpu.memory_space<smem>>
    %571 = vector.broadcast %570 : f32 to vector<14x14xf32>
    %572 = arith.mulf %571, %37 : vector<14x14xf32>
    %573 = arith.addf %569, %572 : vector<14x14xf32>
    %c4_242 = arith.constant 4 : index
    %c22_243 = arith.constant 22 : index
    %574 = memref.load %arg2[%c4_242, %c22_243] : memref<6x27xf32, #tpu.memory_space<smem>>
    %575 = vector.broadcast %574 : f32 to vector<14x14xf32>
    %576 = arith.mulf %575, %38 : vector<14x14xf32>
    %577 = arith.addf %573, %576 : vector<14x14xf32>
    %c4_244 = arith.constant 4 : index
    %c23_245 = arith.constant 23 : index
    %578 = memref.load %arg2[%c4_244, %c23_245] : memref<6x27xf32, #tpu.memory_space<smem>>
    %579 = vector.broadcast %578 : f32 to vector<14x14xf32>
    %580 = arith.mulf %579, %39 : vector<14x14xf32>
    %581 = arith.addf %577, %580 : vector<14x14xf32>
    %c4_246 = arith.constant 4 : index
    %c24_247 = arith.constant 24 : index
    %582 = memref.load %arg2[%c4_246, %c24_247] : memref<6x27xf32, #tpu.memory_space<smem>>
    %583 = vector.broadcast %582 : f32 to vector<14x14xf32>
    %584 = arith.mulf %583, %41 : vector<14x14xf32>
    %585 = arith.addf %581, %584 : vector<14x14xf32>
    %c4_248 = arith.constant 4 : index
    %c25_249 = arith.constant 25 : index
    %586 = memref.load %arg2[%c4_248, %c25_249] : memref<6x27xf32, #tpu.memory_space<smem>>
    %587 = vector.broadcast %586 : f32 to vector<14x14xf32>
    %588 = arith.mulf %587, %42 : vector<14x14xf32>
    %589 = arith.addf %585, %588 : vector<14x14xf32>
    %c4_250 = arith.constant 4 : index
    %c26_251 = arith.constant 26 : index
    %590 = memref.load %arg2[%c4_250, %c26_251] : memref<6x27xf32, #tpu.memory_space<smem>>
    %591 = vector.broadcast %590 : f32 to vector<14x14xf32>
    %592 = arith.mulf %591, %43 : vector<14x14xf32>
    %593 = arith.addf %589, %592 : vector<14x14xf32>
    %c5_252 = arith.constant 5 : index
    %594 = memref.load %arg3[%c5_252] : memref<6xf32, #tpu.memory_space<smem>>
    %595 = vector.broadcast %594 : f32 to vector<14x14xf32>
    %c5_253 = arith.constant 5 : index
    %c0_254 = arith.constant 0 : index
    %596 = memref.load %arg2[%c5_253, %c0_254] : memref<6x27xf32, #tpu.memory_space<smem>>
    %597 = vector.broadcast %596 : f32 to vector<14x14xf32>
    %598 = arith.mulf %597, %5 : vector<14x14xf32>
    %599 = arith.addf %595, %598 : vector<14x14xf32>
    %c5_255 = arith.constant 5 : index
    %c1_256 = arith.constant 1 : index
    %600 = memref.load %arg2[%c5_255, %c1_256] : memref<6x27xf32, #tpu.memory_space<smem>>
    %601 = vector.broadcast %600 : f32 to vector<14x14xf32>
    %602 = arith.mulf %601, %6 : vector<14x14xf32>
    %603 = arith.addf %599, %602 : vector<14x14xf32>
    %c5_257 = arith.constant 5 : index
    %c2_258 = arith.constant 2 : index
    %604 = memref.load %arg2[%c5_257, %c2_258] : memref<6x27xf32, #tpu.memory_space<smem>>
    %605 = vector.broadcast %604 : f32 to vector<14x14xf32>
    %606 = arith.mulf %605, %7 : vector<14x14xf32>
    %607 = arith.addf %603, %606 : vector<14x14xf32>
    %c5_259 = arith.constant 5 : index
    %c3_260 = arith.constant 3 : index
    %608 = memref.load %arg2[%c5_259, %c3_260] : memref<6x27xf32, #tpu.memory_space<smem>>
    %609 = vector.broadcast %608 : f32 to vector<14x14xf32>
    %610 = arith.mulf %609, %9 : vector<14x14xf32>
    %611 = arith.addf %607, %610 : vector<14x14xf32>
    %c5_261 = arith.constant 5 : index
    %c4_262 = arith.constant 4 : index
    %612 = memref.load %arg2[%c5_261, %c4_262] : memref<6x27xf32, #tpu.memory_space<smem>>
    %613 = vector.broadcast %612 : f32 to vector<14x14xf32>
    %614 = arith.mulf %613, %10 : vector<14x14xf32>
    %615 = arith.addf %611, %614 : vector<14x14xf32>
    %c5_263 = arith.constant 5 : index
    %c5_264 = arith.constant 5 : index
    %616 = memref.load %arg2[%c5_263, %c5_264] : memref<6x27xf32, #tpu.memory_space<smem>>
    %617 = vector.broadcast %616 : f32 to vector<14x14xf32>
    %618 = arith.mulf %617, %11 : vector<14x14xf32>
    %619 = arith.addf %615, %618 : vector<14x14xf32>
    %c5_265 = arith.constant 5 : index
    %c6_266 = arith.constant 6 : index
    %620 = memref.load %arg2[%c5_265, %c6_266] : memref<6x27xf32, #tpu.memory_space<smem>>
    %621 = vector.broadcast %620 : f32 to vector<14x14xf32>
    %622 = arith.mulf %621, %13 : vector<14x14xf32>
    %623 = arith.addf %619, %622 : vector<14x14xf32>
    %c5_267 = arith.constant 5 : index
    %c7_268 = arith.constant 7 : index
    %624 = memref.load %arg2[%c5_267, %c7_268] : memref<6x27xf32, #tpu.memory_space<smem>>
    %625 = vector.broadcast %624 : f32 to vector<14x14xf32>
    %626 = arith.mulf %625, %14 : vector<14x14xf32>
    %627 = arith.addf %623, %626 : vector<14x14xf32>
    %c5_269 = arith.constant 5 : index
    %c8_270 = arith.constant 8 : index
    %628 = memref.load %arg2[%c5_269, %c8_270] : memref<6x27xf32, #tpu.memory_space<smem>>
    %629 = vector.broadcast %628 : f32 to vector<14x14xf32>
    %630 = arith.mulf %629, %15 : vector<14x14xf32>
    %631 = arith.addf %627, %630 : vector<14x14xf32>
    %c5_271 = arith.constant 5 : index
    %c9_272 = arith.constant 9 : index
    %632 = memref.load %arg2[%c5_271, %c9_272] : memref<6x27xf32, #tpu.memory_space<smem>>
    %633 = vector.broadcast %632 : f32 to vector<14x14xf32>
    %634 = arith.mulf %633, %19 : vector<14x14xf32>
    %635 = arith.addf %631, %634 : vector<14x14xf32>
    %c5_273 = arith.constant 5 : index
    %c10_274 = arith.constant 10 : index
    %636 = memref.load %arg2[%c5_273, %c10_274] : memref<6x27xf32, #tpu.memory_space<smem>>
    %637 = vector.broadcast %636 : f32 to vector<14x14xf32>
    %638 = arith.mulf %637, %20 : vector<14x14xf32>
    %639 = arith.addf %635, %638 : vector<14x14xf32>
    %c5_275 = arith.constant 5 : index
    %c11_276 = arith.constant 11 : index
    %640 = memref.load %arg2[%c5_275, %c11_276] : memref<6x27xf32, #tpu.memory_space<smem>>
    %641 = vector.broadcast %640 : f32 to vector<14x14xf32>
    %642 = arith.mulf %641, %21 : vector<14x14xf32>
    %643 = arith.addf %639, %642 : vector<14x14xf32>
    %c5_277 = arith.constant 5 : index
    %c12_278 = arith.constant 12 : index
    %644 = memref.load %arg2[%c5_277, %c12_278] : memref<6x27xf32, #tpu.memory_space<smem>>
    %645 = vector.broadcast %644 : f32 to vector<14x14xf32>
    %646 = arith.mulf %645, %23 : vector<14x14xf32>
    %647 = arith.addf %643, %646 : vector<14x14xf32>
    %c5_279 = arith.constant 5 : index
    %c13_280 = arith.constant 13 : index
    %648 = memref.load %arg2[%c5_279, %c13_280] : memref<6x27xf32, #tpu.memory_space<smem>>
    %649 = vector.broadcast %648 : f32 to vector<14x14xf32>
    %650 = arith.mulf %649, %24 : vector<14x14xf32>
    %651 = arith.addf %647, %650 : vector<14x14xf32>
    %c5_281 = arith.constant 5 : index
    %c14_282 = arith.constant 14 : index
    %652 = memref.load %arg2[%c5_281, %c14_282] : memref<6x27xf32, #tpu.memory_space<smem>>
    %653 = vector.broadcast %652 : f32 to vector<14x14xf32>
    %654 = arith.mulf %653, %25 : vector<14x14xf32>
    %655 = arith.addf %651, %654 : vector<14x14xf32>
    %c5_283 = arith.constant 5 : index
    %c15_284 = arith.constant 15 : index
    %656 = memref.load %arg2[%c5_283, %c15_284] : memref<6x27xf32, #tpu.memory_space<smem>>
    %657 = vector.broadcast %656 : f32 to vector<14x14xf32>
    %658 = arith.mulf %657, %27 : vector<14x14xf32>
    %659 = arith.addf %655, %658 : vector<14x14xf32>
    %c5_285 = arith.constant 5 : index
    %c16_286 = arith.constant 16 : index
    %660 = memref.load %arg2[%c5_285, %c16_286] : memref<6x27xf32, #tpu.memory_space<smem>>
    %661 = vector.broadcast %660 : f32 to vector<14x14xf32>
    %662 = arith.mulf %661, %28 : vector<14x14xf32>
    %663 = arith.addf %659, %662 : vector<14x14xf32>
    %c5_287 = arith.constant 5 : index
    %c17_288 = arith.constant 17 : index
    %664 = memref.load %arg2[%c5_287, %c17_288] : memref<6x27xf32, #tpu.memory_space<smem>>
    %665 = vector.broadcast %664 : f32 to vector<14x14xf32>
    %666 = arith.mulf %665, %29 : vector<14x14xf32>
    %667 = arith.addf %663, %666 : vector<14x14xf32>
    %c5_289 = arith.constant 5 : index
    %c18_290 = arith.constant 18 : index
    %668 = memref.load %arg2[%c5_289, %c18_290] : memref<6x27xf32, #tpu.memory_space<smem>>
    %669 = vector.broadcast %668 : f32 to vector<14x14xf32>
    %670 = arith.mulf %669, %33 : vector<14x14xf32>
    %671 = arith.addf %667, %670 : vector<14x14xf32>
    %c5_291 = arith.constant 5 : index
    %c19_292 = arith.constant 19 : index
    %672 = memref.load %arg2[%c5_291, %c19_292] : memref<6x27xf32, #tpu.memory_space<smem>>
    %673 = vector.broadcast %672 : f32 to vector<14x14xf32>
    %674 = arith.mulf %673, %34 : vector<14x14xf32>
    %675 = arith.addf %671, %674 : vector<14x14xf32>
    %c5_293 = arith.constant 5 : index
    %c20_294 = arith.constant 20 : index
    %676 = memref.load %arg2[%c5_293, %c20_294] : memref<6x27xf32, #tpu.memory_space<smem>>
    %677 = vector.broadcast %676 : f32 to vector<14x14xf32>
    %678 = arith.mulf %677, %35 : vector<14x14xf32>
    %679 = arith.addf %675, %678 : vector<14x14xf32>
    %c5_295 = arith.constant 5 : index
    %c21_296 = arith.constant 21 : index
    %680 = memref.load %arg2[%c5_295, %c21_296] : memref<6x27xf32, #tpu.memory_space<smem>>
    %681 = vector.broadcast %680 : f32 to vector<14x14xf32>
    %682 = arith.mulf %681, %37 : vector<14x14xf32>
    %683 = arith.addf %679, %682 : vector<14x14xf32>
    %c5_297 = arith.constant 5 : index
    %c22_298 = arith.constant 22 : index
    %684 = memref.load %arg2[%c5_297, %c22_298] : memref<6x27xf32, #tpu.memory_space<smem>>
    %685 = vector.broadcast %684 : f32 to vector<14x14xf32>
    %686 = arith.mulf %685, %38 : vector<14x14xf32>
    %687 = arith.addf %683, %686 : vector<14x14xf32>
    %c5_299 = arith.constant 5 : index
    %c23_300 = arith.constant 23 : index
    %688 = memref.load %arg2[%c5_299, %c23_300] : memref<6x27xf32, #tpu.memory_space<smem>>
    %689 = vector.broadcast %688 : f32 to vector<14x14xf32>
    %690 = arith.mulf %689, %39 : vector<14x14xf32>
    %691 = arith.addf %687, %690 : vector<14x14xf32>
    %c5_301 = arith.constant 5 : index
    %c24_302 = arith.constant 24 : index
    %692 = memref.load %arg2[%c5_301, %c24_302] : memref<6x27xf32, #tpu.memory_space<smem>>
    %693 = vector.broadcast %692 : f32 to vector<14x14xf32>
    %694 = arith.mulf %693, %41 : vector<14x14xf32>
    %695 = arith.addf %691, %694 : vector<14x14xf32>
    %c5_303 = arith.constant 5 : index
    %c25_304 = arith.constant 25 : index
    %696 = memref.load %arg2[%c5_303, %c25_304] : memref<6x27xf32, #tpu.memory_space<smem>>
    %697 = vector.broadcast %696 : f32 to vector<14x14xf32>
    %698 = arith.mulf %697, %42 : vector<14x14xf32>
    %699 = arith.addf %695, %698 : vector<14x14xf32>
    %c5_305 = arith.constant 5 : index
    %c26_306 = arith.constant 26 : index
    %700 = memref.load %arg2[%c5_305, %c26_306] : memref<6x27xf32, #tpu.memory_space<smem>>
    %701 = vector.broadcast %700 : f32 to vector<14x14xf32>
    %702 = arith.mulf %701, %43 : vector<14x14xf32>
    %703 = arith.addf %699, %702 : vector<14x14xf32>
    %704 = vector.shape_cast %153 : vector<14x14xf32> to vector<1x14x14xf32>
    %705 = vector.shape_cast %263 : vector<14x14xf32> to vector<1x14x14xf32>
    %706 = vector.shape_cast %373 : vector<14x14xf32> to vector<1x14x14xf32>
    %707 = vector.shape_cast %483 : vector<14x14xf32> to vector<1x14x14xf32>
    %708 = vector.shape_cast %593 : vector<14x14xf32> to vector<1x14x14xf32>
    %709 = vector.shape_cast %703 : vector<14x14xf32> to vector<1x14x14xf32>
    %710 = tpu.concatenate %704, %705, %706, %707, %708, %709 in 0 : vector<1x14x14xf32>, vector<1x14x14xf32>, vector<1x14x14xf32>, vector<1x14x14xf32>, vector<1x14x14xf32>, vector<1x14x14xf32> -> vector<6x14x14xf32>
    %c0_307 = arith.constant 0 : index
    %c0_308 = arith.constant 0 : index
    %c0_309 = arith.constant 0 : index
    %c0_310 = arith.constant 0 : index
    %711 = vector.load %arg4[%c0_307, %c0_308, %c0_309, %c0_310] : memref<1x6x14x14xf32, #tpu.memory_space<vmem>>, vector<1x6x14x14xf32>
    %712 = vector.shape_cast %711 : vector<1x6x14x14xf32> to vector<6x14x14xf32>
    %713 = vector.shape_cast %710 : vector<6x14x14xf32> to vector<1x6x14x14xf32>
    tpu.vector_store %arg4[%c0_307, %c0_308, %c0_309, %c0_310], %713 {strides = array<i32>} : memref<1x6x14x14xf32, #tpu.memory_space<vmem>>, vector<1x6x14x14xf32>,
    return
  }
  func.func @transform_0(%arg0: i32) -> (i32, i32, i32, i32) {
    %c0_i32 = arith.constant 0 : i32
    %c0_i32_0 = arith.constant 0 : i32
    %c0_i32_1 = arith.constant 0 : i32
    %c0_i32_2 = arith.constant 0 : i32
    return %arg0, %c0_i32, %c0_i32_0, %c0_i32_1 : i32, i32, i32, i32
  }
  func.func @transform_1(%arg0: i32) -> (i32, i32) {
    %c0_i32 = arith.constant 0 : i32
    %c0_i32_0 = arith.constant 0 : i32
    %c0_i32_1 = arith.constant 0 : i32
    return %c0_i32, %c0_i32_0 : i32, i32
  }
  func.func @transform_2(%arg0: i32) -> i32 {
    %c0_i32 = arith.constant 0 : i32
    %c0_i32_0 = arith.constant 0 : i32
    return %c0_i32 : i32
  }
  func.func @transform_3(%arg0: i32) -> (i32, i32, i32, i32) {
    %c0_i32 = arith.constant 0 : i32
    %c0_i32_0 = arith.constant 0 : i32
    %c0_i32_1 = arith.constant 0 : i32
    %c0_i32_2 = arith.constant 0 : i32
    return %arg0, %c0_i32, %c0_i32_0, %c0_i32_1 : i32, i32, i32, i32
  }
}

</mosaic_0001>

<llo_original>
// kernel: tpu_custom_call.1
$region0: #{tpu_custom_call.1}
  #allocation0 [shape = 'u32[]', space=smem, size = 0x4, offset = 0x4, fixed_abs, tag = 'smem constant byte address 0x4 - core index']
  #allocation1 [shape = 'u32[72,128]{1,0:T(1,128)}', space=vmem, size = 0x9000, scoped, tag = 'internal scratch']
  %s0 = inlined_call_operand.hbm [shape: f32[2,3,16,16], index: 0, kind: input, shape index: {}]
  %s1 = inlined_call_operand.hbm [shape: f32[6,27], index: 1, kind: input, shape index: {}]
  %s2 = inlined_call_operand.vmem [shape: f32[6], index: 2, kind: input, shape index: {}]
  %s3 = inlined_call_operand.vmem [shape: f32[2,6,14,14], index: 3, kind: output, shape index: {}]
  %s4 = sld [smem:[#allocation0]]
  $region57: #{tpu_custom_call.1} parent=0
    _
  %s6 = ssub.s32 1, %s4
  %s7 = scalar_select 0, %s6, %s4
  $region1: #{tpu_custom_call.1} parent=0
    #allocation2 [shape = 'u8[49152]{0}', space=vmem, size = 0xc000, scoped, tag = 'input window, operand 0']
    #allocation3 [shape = 's32[2]{0}', space=sflag, size = 0x8, scoped, tag = 'scoped memory for tpu_custom_call.1']
    #allocation4 [shape = 's32[2]{0}', space=sflag, size = 0x8, scoped, tag = 'scoped memory for tpu_custom_call.1']
    #allocation5 [shape = 's32[2]{0}', space=sflag, size = 0x8, scoped, tag = 'scoped memory for tpu_custom_call.1']
    #allocation6 [shape = 'u8[4096]{0}', space=smem, size = 0x1000, scoped, tag = 'input window, operand 1, single buffered']
    #allocation7 [shape = 'u8[512]{0}', space=smem, size = 0x200, scoped, tag = 'input window, operand 2, single buffered']
    %8 = vsyncpa [#allocation3], 0
    %s9 = scalar_lea.sflag [#allocation3], 1
    %10 = vsyncpa %s9, 0
    %11 = vsyncpa [#allocation4], 0
    %12 = vsyncpa [#allocation5], 0
    loop: start=0, step=1, limit=4
    $region2: #{tpu_custom_call.1} parent=1 // loop_pre_header
      _
    $region3: #{tpu_custom_call.1} parent=1 // loop_header
      %s14 = sphi 0, %s18
      %p15 = scmp.ge.s32.totalorder %s14, 4
      %s24 = sphi 0, %s26
      %s27 = sphi 0, %s24
      %s28 = sphi 0, %s27
      %s44 = sphi 0, %s28
      %s48 = sphi 0, %s48
      %s50 = sphi 0, %s48
      %s51 = sphi 0, %s50
      %s65 = sphi 0, %s51
      %s69 = sphi 0, %s69
      %s71 = sphi 0, %s69
      %s72 = sphi 0, %s71
      %s86 = sphi 0, %s72
      %s92 = sphi 0, %s94
      %s95 = sphi 0, %s92
      %s96 = sphi 0, %s95
      %s112 = sphi 0, %s96
    $region4: #{tpu_custom_call.1} parent=1 // loop_header_branch
      %17 = sbr.rel (%p15) target = $region8
    $region5: #{tpu_custom_call.1} parent=1 // loop_body
      %s19 = ssub.s32 %s14, 1
      %s20 = ssub.s32 %s14, 2
      %s21 = sadd.s32 %s14, 1
      %s22 = ssub.s32 %s14, %s21
      %p23 = scmp.eq.s32.totalorder %s22, 0
      %s25 = sadd.s32 %s24, 1
      %s26 = scalar_select %p23, %s24, %s25
      %p29 = pneg %p23
      %p30 = scmp.eq.s32.totalorder %s14, 1
      %p31 = por %p29, %p30
      %p32 = scmp.ne.s32.totalorder %s24, %s27
      %p33 = scmp.eq.s32.totalorder %s14, 0
      %p34 = por %p32, %p33
      %p35 = scmp.ne.s32.totalorder %s24, %s27
      %p36 = scmp.eq.s32.totalorder %s19, 1
      %p37 = por %p35, %p36
      %p38 = scmp.ne.s32.totalorder %s27, %s28
      %p39 = scmp.eq.s32.totalorder %s19, 0
      %p40 = por %p38, %p39
      %p41 = scmp.ne.s32.totalorder %s27, %s28
      %p42 = scmp.eq.s32.totalorder %s20, 1
      %p43 = por %p41, %p42
      %p45 = scmp.ne.s32.totalorder %s28, %s44
      %p46 = scmp.eq.s32.totalorder %s20, 0
      %p47 = por %p45, %p46
      %s49 = sadd.s32 %s48, 1
      %p52 = scmp.eq.s32.totalorder %s14, 1
      %p53 = scmp.ne.s32.totalorder %s48, %s50
      %p54 = scmp.eq.s32.totalorder %s14, 0
      %p55 = por %p53, %p54
      %p56 = scmp.ne.s32.totalorder %s48, %s50
      %p57 = scmp.eq.s32.totalorder %s19, 1
      %p58 = por %p56, %p57
      %p59 = scmp.ne.s32.totalorder %s50, %s51
      %p60 = scmp.eq.s32.totalorder %s19, 0
      %p61 = por %p59, %p60
      %p62 = scmp.ne.s32.totalorder %s50, %s51
      %p63 = scmp.eq.s32.totalorder %s20, 1
      %p64 = por %p62, %p63
      %p66 = scmp.ne.s32.totalorder %s51, %s65
      %p67 = scmp.eq.s32.totalorder %s20, 0
      %p68 = por %p66, %p67
      %s70 = sadd.s32 %s69, 1
      %p73 = scmp.eq.s32.totalorder %s14, 1
      %p74 = scmp.ne.s32.totalorder %s69, %s71
      %p75 = scmp.eq.s32.totalorder %s14, 0
      %p76 = por %p74, %p75
      %p77 = scmp.ne.s32.totalorder %s69, %s71
      %p78 = scmp.eq.s32.totalorder %s19, 1
      %p79 = por %p77, %p78
      %p80 = scmp.ne.s32.totalorder %s71, %s72
      %p81 = scmp.eq.s32.totalorder %s19, 0
      %p82 = por %p80, %p81
      %p83 = scmp.ne.s32.totalorder %s71, %s72
      %p84 = scmp.eq.s32.totalorder %s20, 1
      %p85 = por %p83, %p84
      %p87 = scmp.ne.s32.totalorder %s72, %s86
      %p88 = scmp.eq.s32.totalorder %s20, 0
      %p89 = por %p87, %p88
      %s90 = ssub.s32 %s14, %s21
      %p91 = scmp.eq.s32.totalorder %s90, 0
      %s93 = sadd.s32 %s92, 1
      %s94 = scalar_select %p91, %s92, %s93
      %p97 = pneg %p91
      %p98 = scmp.eq.s32.totalorder %s14, 1
      %p99 = por %p97, %p98
      %p100 = scmp.ne.s32.totalorder %s92, %s95
      %p101 = scmp.eq.s32.totalorder %s14, 0
      %p102 = por %p100, %p101
      %p103 = scmp.ne.s32.totalorder %s92, %s95
      %p104 = scmp.eq.s32.totalorder %s19, 1
      %p105 = por %p103, %p104
      %p106 = scmp.ne.s32.totalorder %s95, %s96
      %p107 = scmp.eq.s32.totalorder %s19, 0
      %p108 = por %p106, %p107
      %p109 = scmp.ne.s32.totalorder %s95, %s96
      %p110 = scmp.eq.s32.totalorder %s20, 1
      %p111 = por %p109, %p110
      %p113 = scmp.ne.s32.totalorder %s96, %s112
      %p114 = scmp.eq.s32.totalorder %s20, 0
      %p115 = por %p113, %p114
      %p116 = scmp.le.s32.totalorder 1, %s14
      %p117 = scmp.lt.s32.totalorder %s14, 3
      %p118 = pnand %p116, %p117
      %p119 = pneg %p118
      // Predicated region
      $region9: #{tpu_custom_call.1} parent=5 // pred_check
        _
      $region10: #{tpu_custom_call.1} parent=5 // pred_check_branch
        %121 = sbr.rel (%p118) target = $region12
      $region11: #{tpu_custom_call.1} parent=5 // pred_region
        %s122 = ssub.s32 %s14, 1
        // Predicated region
        $region13: #{tpu_custom_call.1} parent=11 // pred_check
          %p123 = pneg %p61
        $region14: #{tpu_custom_call.1} parent=11 // pred_check_branch
          %125 = sbr.rel (%p123) target = $region16
        $region15: #{tpu_custom_call.1} parent=11 // pred_region
          %127 = vsyncadd [#allocation4], 0
          %s129 = sshll.u32 %s1, 4
          %s130 = int_to_ptr.hbm [resolvable:$true] %s129
          %132 = dma.hbm_to_smem %s130, 128, [#allocation6], [#allocation4]
        $region16: #{tpu_custom_call.1} parent=11 // pred_fallthru
          _
        // Predicated region
        $region17: #{tpu_custom_call.1} parent=11 // pred_check
          %p133 = pneg %p82
        $region18: #{tpu_custom_call.1} parent=11 // pred_check_branch
          %135 = sbr.rel (%p133) target = $region20
        $region19: #{tpu_custom_call.1} parent=11 // pred_region
          %137 = vsyncadd [#allocation5], 0
          %s139 = sshll.u32 %s2, 4
          %s140 = int_to_ptr.vmem [resolvable:$true] %s139
          %142 = dma.vmem_to_smem %s140, 16, [#allocation7], [#allocation5]
        $region20: #{tpu_custom_call.1} parent=11 // pred_fallthru
          _
      $region12: #{tpu_custom_call.1} parent=5 // pred_fallthru
        _
      %p143 = scmp.lt.s32.totalorder %s14, 2
      // Predicated region
      $region21: #{tpu_custom_call.1} parent=5 // pred_check
        %p144 = pneg %p143
      $region22: #{tpu_custom_call.1} parent=5 // pred_check_branch
        %146 = sbr.rel (%p144) target = $region24
      $region23: #{tpu_custom_call.1} parent=5 // pred_region
        // Predicated region
        $region25: #{tpu_custom_call.1} parent=23 // pred_check
          %p147 = pneg %p34
        $region26: #{tpu_custom_call.1} parent=23 // pred_check_branch
          %149 = sbr.rel (%p147) target = $region28
        $region27: #{tpu_custom_call.1} parent=23 // pred_region
          %s150 = sand.u32 %s24, 1
          %s151 = scalar_lea.sflag [#allocation3], %s150
          %s152 = sand.u32 %s24, 1
          %s153 = smul.addr %s152, 48
          %s154 = scalar_lea.vmem [#allocation2], %s153
          %156 = vsyncadd %s151, 0
          %s157 = smul.addr %s14, 6
          %s158 = smul.addr %s157, 8
          %s159 = scalar_lea.hbm %s0, %s158
          %s160 = sshll.u32 %s159, 4
          %s161 = int_to_ptr.hbm [resolvable:$true] %s160
          %s162 = sshll.u32 %s154, 4
          %s163 = int_to_ptr.vmem [resolvable:$true] %s162
          %168 = dma.hbm_to_vmem [thread:$0]  %s161, 768, %s163, %s151, 128, 128, 8
        $region28: #{tpu_custom_call.1} parent=23 // pred_fallthru
          _
      $region24: #{tpu_custom_call.1} parent=5 // pred_fallthru
        _
      %p169 = scmp.le.s32.totalorder 1, %s14
      %p170 = scmp.lt.s32.totalorder %s14, 3
      %p171 = pnand %p169, %p170
      %p172 = pneg %p171
      // Predicated region
      $region29: #{tpu_custom_call.1} parent=5 // pred_check
        _
      $region30: #{tpu_custom_call.1} parent=5 // pred_check_branch
        %174 = sbr.rel (%p171) target = $region32
      $region31: #{tpu_custom_call.1} parent=5 // pred_region
        %s175 = ssub.s32 %s14, 1
        %s176 = sand.u32 %s27, 1
        %s177 = scalar_lea.sflag [#allocation3], %s176
        %s178 = sand.u32 %s27, 1
        %s179 = smul.addr %s178, 48
        %s180 = scalar_lea.vmem [#allocation2], %s179
        // Predicated region
        $region33: #{tpu_custom_call.1} parent=31 // pred_check
          %p181 = pneg %p40
        $region34: #{tpu_custom_call.1} parent=31 // pred_check_branch
          %183 = sbr.rel (%p181) target = $region36
        $region35: #{tpu_custom_call.1} parent=31 // pred_region
          %185 = dma.done %s177, 768
        $region36: #{tpu_custom_call.1} parent=31 // pred_fallthru
          _
        // Predicated region
        $region37: #{tpu_custom_call.1} parent=31 // pred_check
          %p186 = pneg %p61
        $region38: #{tpu_custom_call.1} parent=31 // pred_check_branch
          %188 = sbr.rel (%p186) target = $region40
        $region39: #{tpu_custom_call.1} parent=31 // pred_region
          %190 = dma.done [#allocation4], 128
        $region40: #{tpu_custom_call.1} parent=31 // pred_fallthru
          _
        // Predicated region
        $region41: #{tpu_custom_call.1} parent=31 // pred_check
          %p191 = pneg %p82
        $region42: #{tpu_custom_call.1} parent=31 // pred_check_branch
          %193 = sbr.rel (%p191) target = $region44
        $region43: #{tpu_custom_call.1} parent=31 // pred_region
          %195 = dma.done [#allocation5], 16
        $region44: #{tpu_custom_call.1} parent=31 // pred_fallthru
          _
        %196 = sfence
        %s197 = sand.u32 %s27, 1
        %s198 = scalar_lea.sflag [#allocation3], %s197
        %s199 = sand.u32 %s27, 1
        %s200 = smul.addr %s199, 48
        %s201 = scalar_lea.vmem [#allocation2], %s200
        %p202 = pneg %p40
        %p203 = pneg %p37
        %p204 = pneg %p61
        %p205 = pneg %p58
        %p206 = pneg %p82
        %p207 = pneg %p79
        %p208 = pneg %p108
        %p209 = pneg %p105
        %p210 = scmp.lt.s32.totalorder %s19, 1
        %s211 = scalar_select %p210, %s19, 1
        %s212 = smul.addr %s211, 12
        %s213 = smul.addr %s212, 8
        %s214 = scalar_lea.vmem %s3, %s213
        %p215 = scmp.lt.s32.totalorder %s19, 1
        %s216 = scalar_select %p215, %s19, 1
        %s217 = smul.addr %s216, 12
        %s218 = smul.addr %s217, 8
        %s219 = scalar_lea.vmem %s3, %s218
        %v220 = vld [vmem:[%s180] sm:$0xff]
        %v221 = vld [vmem:[%s180 + $0x8] sm:$0xff]
        %v222 = vld [vmem:[%s180 + $0x10] sm:$0xff]
        %v223 = vld [vmem:[%s180 + $0x18] sm:$0xff]
        %v224 = vld [vmem:[%s180 + $0x20] sm:$0xff]
        %v225 = vld [vmem:[%s180 + $0x28] sm:$0xff]
        %s226 = sld [smem:[#allocation7]]
        %v227 = vstv %s226
        %s228 = sld [smem:[#allocation6]]
        %v229 = vstv %s228
        %v230 = vmul.f32 %v229, %v220
        %v231 = vmul.f32 %v229, %v221
        %v232 = vadd.f32 %v227, %v230
        %v233 = vadd.f32 %v227, %v231
        %s234 = sld [smem:[#allocation6 + $0x1]]
        %v235 = vstv %s234
        %v236 = vmul.f32 %v235, %v220
        %v237 = vmul.f32 %v235, %v221
        %240 = vrot.lane.b32.xlu0 %v236, 127
        %v241 = vpop.permute.xlu0 %240
        %242 = vrot.lane.b32.xlu0 %v237, 127
        %v243 = vpop.permute.xlu0 %242
        %v246 = vadd.f32 %v232, %v241
        %v247 = vadd.f32 %v233, %v243
        %s248 = sld [smem:[#allocation6 + $0x2]]
        %v249 = vstv %s248
        %v250 = vmul.f32 %v249, %v220
        %v251 = vmul.f32 %v249, %v221
        %254 = vrot.lane.b32.xlu0 %v250, 126
        %v255 = vpop.permute.xlu0 %254
        %256 = vrot.lane.b32.xlu0 %v251, 126
        %v257 = vpop.permute.xlu0 %256
        %v260 = vadd.f32 %v246, %v255
        %v261 = vadd.f32 %v247, %v257
        %s262 = sld [smem:[#allocation6 + $0x3]]
        %v263 = vstv %s262
        %v264 = vmul.f32 %v263, %v220
        %v265 = vmul.f32 %v263, %v221
        %vm268 = vcmask 1046528
        %v269 = vrot.slane %v264, 1
        %v270 = vrot.slane %v265, 1
        %v271 = vsel %vm268, %v269, %v270
        %v274 = vadd.f32 %v260, %v271
        %v275 = vadd.f32 %v261, %v270
        %s276 = sld [smem:[#allocation6 + $0x4]]
        %v277 = vstv %s276
        %v278 = vmul.f32 %v277, %v220
        %v279 = vmul.f32 %v277, %v221
        %v282 = vrot.slane %v278, 1
        %v283 = vrot.slane %v279, 1
        %v284 = vsel %vm268, %v282, %v283
        %285 = vrot.lane.b32.xlu0 %v284, 127
        %v286 = vpop.permute.xlu0 %285
        %287 = vrot.lane.b32.xlu0 %v283, 127
        %v288 = vpop.permute.xlu0 %287
        %v291 = vadd.f32 %v274, %v286
        %v292 = vadd.f32 %v275, %v288
        %s293 = sld [smem:[#allocation6 + $0x5]]
        %v294 = vstv %s293
        %v295 = vmul.f32 %v294, %v220
        %v296 = vmul.f32 %v294, %v221
        %v299 = vrot.slane %v295, 1
        %v300 = vrot.slane %v296, 1
        %v301 = vsel %vm268, %v299, %v300
        %302 = vrot.lane.b32.xlu0 %v301, 126
        %v303 = vpop.permute.xlu0 %302
        %304 = vrot.lane.b32.xlu0 %v300, 126
        %v305 = vpop.permute.xlu0 %304
        %v308 = vadd.f32 %v291, %v303
        %v309 = vadd.f32 %v292, %v305
        %s310 = sld [smem:[#allocation6 + $0x6]]
        %v311 = vstv %s310
        %v312 = vmul.f32 %v311, %v220
        %v313 = vmul.f32 %v311, %v221
        %vm316 = vcmask 1045504
        %v317 = vrot.slane %v312, 2
        %v318 = vrot.slane %v313, 2
        %v319 = vsel %vm316, %v317, %v318
        %v322 = vadd.f32 %v308, %v319
        %v323 = vadd.f32 %v309, %v318
        %s324 = sld [smem:[#allocation6 + $0x7]]
        %v325 = vstv %s324
        %v326 = vmul.f32 %v325, %v220
        %v327 = vmul.f32 %v325, %v221
        %v330 = vrot.slane %v326, 2
        %v331 = vrot.slane %v327, 2
        %v332 = vsel %vm316, %v330, %v331
        %333 = vrot.lane.b32.xlu0 %v332, 127
        %v334 = vpop.permute.xlu0 %333
        %335 = vrot.lane.b32.xlu0 %v331, 127
        %v336 = vpop.permute.xlu0 %335
        %v339 = vadd.f32 %v322, %v334
        %v340 = vadd.f32 %v323, %v336
        %s341 = sld [smem:[#allocation6 + $0x8]]
        %v342 = vstv %s341
        %v343 = vmul.f32 %v342, %v220
        %v344 = vmul.f32 %v342, %v221
        %v347 = vrot.slane %v343, 2
        %v348 = vrot.slane %v344, 2
        %v349 = vsel %vm316, %v347, %v348
        %350 = vrot.lane.b32.xlu0 %v349, 126
        %v351 = vpop.permute.xlu0 %350
        %352 = vrot.lane.b32.xlu0 %v348, 126
        %v353 = vpop.permute.xlu0 %352
        %v356 = vadd.f32 %v339, %v351
        %v357 = vadd.f32 %v340, %v353
        %s358 = sld [smem:[#allocation6 + $0x9]]
        %v359 = vstv %s358
        %v360 = vmul.f32 %v359, %v222
        %v361 = vmul.f32 %v359, %v223
        %v362 = vadd.f32 %v356, %v360
        %v363 = vadd.f32 %v357, %v361
        %s364 = sld [smem:[#allocation6 + $0xa]]
        %v365 = vstv %s364
        %v366 = vmul.f32 %v365, %v222
        %v367 = vmul.f32 %v365, %v223
        %370 = vrot.lane.b32.xlu0 %v366, 127
        %v371 = vpop.permute.xlu0 %370
        %372 = vrot.lane.b32.xlu0 %v367, 127
        %v373 = vpop.permute.xlu0 %372
        %v376 = vadd.f32 %v362, %v371
        %v377 = vadd.f32 %v363, %v373
        %s378 = sld [smem:[#allocation6 + $0xb]]
        %v379 = vstv %s378
        %v380 = vmul.f32 %v379, %v222
        %v381 = vmul.f32 %v379, %v223
        %384 = vrot.lane.b32.xlu0 %v380, 126
        %v385 = vpop.permute.xlu0 %384
        %386 = vrot.lane.b32.xlu0 %v381, 126
        %v387 = vpop.permute.xlu0 %386
        %v390 = vadd.f32 %v376, %v385
        %v391 = vadd.f32 %v377, %v387
        %s392 = sld [smem:[#allocation6 + $0xc]]
        %v393 = vstv %s392
        %v394 = vmul.f32 %v393, %v222
        %v395 = vmul.f32 %v393, %v223
        %v398 = vrot.slane %v394, 1
        %v399 = vrot.slane %v395, 1
        %v400 = vsel %vm268, %v398, %v399
        %v403 = vadd.f32 %v390, %v400
        %v404 = vadd.f32 %v391, %v399
        %s405 = sld [smem:[#allocation6 + $0xd]]
        %v406 = vstv %s405
        %v407 = vmul.f32 %v406, %v222
        %v408 = vmul.f32 %v406, %v223
        %v411 = vrot.slane %v407, 1
        %v412 = vrot.slane %v408, 1
        %v413 = vsel %vm268, %v411, %v412
        %414 = vrot.lane.b32.xlu0 %v413, 127
        %v415 = vpop.permute.xlu0 %414
        %416 = vrot.lane.b32.xlu0 %v412, 127
        %v417 = vpop.permute.xlu0 %416
        %v420 = vadd.f32 %v403, %v415
        %v421 = vadd.f32 %v404, %v417
        %s422 = sld [smem:[#allocation6 + $0xe]]
        %v423 = vstv %s422
        %v424 = vmul.f32 %v423, %v222
        %v425 = vmul.f32 %v423, %v223
        %v428 = vrot.slane %v424, 1
        %v429 = vrot.slane %v425, 1
        %v430 = vsel %vm268, %v428, %v429
        %431 = vrot.lane.b32.xlu0 %v430, 126
        %v432 = vpop.permute.xlu0 %431
        %433 = vrot.lane.b32.xlu0 %v429, 126
        %v434 = vpop.permute.xlu0 %433
        %v437 = vadd.f32 %v420, %v432
        %v438 = vadd.f32 %v421, %v434
        %s439 = sld [smem:[#allocation6 + $0xf]]
        %v440 = vstv %s439
        %v441 = vmul.f32 %v440, %v222
        %v442 = vmul.f32 %v440, %v223
        %v445 = vrot.slane %v441, 2
        %v446 = vrot.slane %v442, 2
        %v447 = vsel %vm316, %v445, %v446
        %v450 = vadd.f32 %v437, %v447
        %v451 = vadd.f32 %v438, %v446
        %s452 = sld [smem:[#allocation6 + $0x10]]
        %v453 = vstv %s452
        %v454 = vmul.f32 %v453, %v222
        %v455 = vmul.f32 %v453, %v223
        %v458 = vrot.slane %v454, 2
        %v459 = vrot.slane %v455, 2
        %v460 = vsel %vm316, %v458, %v459
        %461 = vrot.lane.b32.xlu0 %v460, 127
        %v462 = vpop.permute.xlu0 %461
        %463 = vrot.lane.b32.xlu0 %v459, 127
        %v464 = vpop.permute.xlu0 %463
        %v467 = vadd.f32 %v450, %v462
        %v468 = vadd.f32 %v451, %v464
        %s469 = sld [smem:[#allocation6 + $0x11]]
        %v470 = vstv %s469
        %v471 = vmul.f32 %v470, %v222
        %v472 = vmul.f32 %v470, %v223
        %v475 = vrot.slane %v471, 2
        %v476 = vrot.slane %v472, 2
        %v477 = vsel %vm316, %v475, %v476
        %478 = vrot.lane.b32.xlu0 %v477, 126
        %v479 = vpop.permute.xlu0 %478
        %480 = vrot.lane.b32.xlu0 %v476, 126
        %v481 = vpop.permute.xlu0 %480
        %v484 = vadd.f32 %v467, %v479
        %v485 = vadd.f32 %v468, %v481
        %s486 = sld [smem:[#allocation6 + $0x12]]
        %v487 = vstv %s486
        %v488 = vmul.f32 %v487, %v224
        %v489 = vmul.f32 %v487, %v225
        %v490 = vadd.f32 %v484, %v488
        %v491 = vadd.f32 %v485, %v489
        %s492 = sld [smem:[#allocation6 + $0x13]]
        %v493 = vstv %s492
        %v494 = vmul.f32 %v493, %v224
        %v495 = vmul.f32 %v493, %v225
        %498 = vrot.lane.b32.xlu0 %v494, 127
        %v499 = vpop.permute.xlu0 %498
        %500 = vrot.lane.b32.xlu0 %v495, 127
        %v501 = vpop.permute.xlu0 %500
        %v504 = vadd.f32 %v490, %v499
        %v505 = vadd.f32 %v491, %v501
        %s506 = sld [smem:[#allocation6 + $0x14]]
        %v507 = vstv %s506
        %v508 = vmul.f32 %v507, %v224
        %v509 = vmul.f32 %v507, %v225
        %512 = vrot.lane.b32.xlu0 %v508, 126
        %v513 = vpop.permute.xlu0 %512
        %514 = vrot.lane.b32.xlu0 %v509, 126
        %v515 = vpop.permute.xlu0 %514
        %v518 = vadd.f32 %v504, %v513
        %v519 = vadd.f32 %v505, %v515
        %s520 = sld [smem:[#allocation6 + $0x15]]
        %v521 = vstv %s520
        %v522 = vmul.f32 %v521, %v224
        %v523 = vmul.f32 %v521, %v225
        %v526 = vrot.slane %v522, 1
        %v527 = vrot.slane %v523, 1
        %v528 = vsel %vm268, %v526, %v527
        %v531 = vadd.f32 %v518, %v528
        %v532 = vadd.f32 %v519, %v527
        %s533 = sld [smem:[#allocation6 + $0x16]]
        %v534 = vstv %s533
        %v535 = vmul.f32 %v534, %v224
        %v536 = vmul.f32 %v534, %v225
        %v539 = vrot.slane %v535, 1
        %v540 = vrot.slane %v536, 1
        %v541 = vsel %vm268, %v539, %v540
        %542 = vrot.lane.b32.xlu0 %v541, 127
        %v543 = vpop.permute.xlu0 %542
        %544 = vrot.lane.b32.xlu0 %v540, 127
        %v545 = vpop.permute.xlu0 %544
        %v548 = vadd.f32 %v531, %v543
        %v549 = vadd.f32 %v532, %v545
        %s550 = sld [smem:[#allocation6 + $0x17]]
        %v551 = vstv %s550
        %v552 = vmul.f32 %v551, %v224
        %v553 = vmul.f32 %v551, %v225
        %v556 = vrot.slane %v552, 1
        %v557 = vrot.slane %v553, 1
        %v558 = vsel %vm268, %v556, %v557
        %559 = vrot.lane.b32.xlu0 %v558, 126
        %v560 = vpop.permute.xlu0 %559
        %561 = vrot.lane.b32.xlu0 %v557, 126
        %v562 = vpop.permute.xlu0 %561
        %v565 = vadd.f32 %v548, %v560
        %v566 = vadd.f32 %v549, %v562
        %s567 = sld [smem:[#allocation6 + $0x18]]
        %v568 = vstv %s567
        %v569 = vmul.f32 %v568, %v224
        %v570 = vmul.f32 %v568, %v225
        %v573 = vrot.slane %v569, 2
        %v574 = vrot.slane %v570, 2
        %v575 = vsel %vm316, %v573, %v574
        %v578 = vadd.f32 %v565, %v575
        %v579 = vadd.f32 %v566, %v574
        %s580 = sld [smem:[#allocation6 + $0x19]]
        %v581 = vstv %s580
        %v582 = vmul.f32 %v581, %v224
        %v583 = vmul.f32 %v581, %v225
        %v586 = vrot.slane %v582, 2
        %v587 = vrot.slane %v583, 2
        %v588 = vsel %vm316, %v586, %v587
        %589 = vrot.lane.b32.xlu0 %v588, 127
        %v590 = vpop.permute.xlu0 %589
        %591 = vrot.lane.b32.xlu0 %v587, 127
        %v592 = vpop.permute.xlu0 %591
        %v595 = vadd.f32 %v578, %v590
        %v596 = vadd.f32 %v579, %v592
        %s597 = sld [smem:[#allocation6 + $0x1a]]
        %v598 = vstv %s597
        %v599 = vmul.f32 %v598, %v224
        %v600 = vmul.f32 %v598, %v225
        %v603 = vrot.slane %v599, 2
        %v604 = vrot.slane %v600, 2
        %v605 = vsel %vm316, %v603, %v604
        %606 = vrot.lane.b32.xlu0 %v605, 126
        %v607 = vpop.permute.xlu0 %606
        %608 = vrot.lane.b32.xlu0 %v604, 126
        %v609 = vpop.permute.xlu0 %608
        %v612 = vadd.f32 %v595, %v607
        %v613 = vadd.f32 %v596, %v609
        %s614 = sld [smem:[#allocation7 + $0x1]]
        %v615 = vstv %s614
        %s616 = sld [smem:[#allocation6 + $0x80]]
        %v617 = vstv %s616
        %v618 = vmul.f32 %v617, %v220
        %v619 = vmul.f32 %v617, %v221
        %v620 = vadd.f32 %v615, %v618
        %v621 = vadd.f32 %v615, %v619
        %s622 = sld [smem:[#allocation6 + $0x81]]
        %v623 = vstv %s622
        %v624 = vmul.f32 %v623, %v220
        %v625 = vmul.f32 %v623, %v221
        %628 = vrot.lane.b32.xlu0 %v624, 127
        %v629 = vpop.permute.xlu0 %628
        %630 = vrot.lane.b32.xlu0 %v625, 127
        %v631 = vpop.permute.xlu0 %630
        %v634 = vadd.f32 %v620, %v629
        %v635 = vadd.f32 %v621, %v631
        %s636 = sld [smem:[#allocation6 + $0x82]]
        %v637 = vstv %s636
        %v638 = vmul.f32 %v637, %v220
        %v639 = vmul.f32 %v637, %v221
        %642 = vrot.lane.b32.xlu0 %v638, 126
        %v643 = vpop.permute.xlu0 %642
        %644 = vrot.lane.b32.xlu0 %v639, 126
        %v645 = vpop.permute.xlu0 %644
        %v648 = vadd.f32 %v634, %v643
        %v649 = vadd.f32 %v635, %v645
        %s650 = sld [smem:[#allocation6 + $0x83]]
        %v651 = vstv %s650
        %v652 = vmul.f32 %v651, %v220
        %v653 = vmul.f32 %v651, %v221
        %v656 = vrot.slane %v652, 1
        %v657 = vrot.slane %v653, 1
        %v658 = vsel %vm268, %v656, %v657
        %v661 = vadd.f32 %v648, %v658
        %v662 = vadd.f32 %v649, %v657
        %s663 = sld [smem:[#allocation6 + $0x84]]
        %v664 = vstv %s663
        %v665 = vmul.f32 %v664, %v220
        %v666 = vmul.f32 %v664, %v221
        %v669 = vrot.slane %v665, 1
        %v670 = vrot.slane %v666, 1
        %v671 = vsel %vm268, %v669, %v670
        %672 = vrot.lane.b32.xlu0 %v671, 127
        %v673 = vpop.permute.xlu0 %672
        %674 = vrot.lane.b32.xlu0 %v670, 127
        %v675 = vpop.permute.xlu0 %674
        %v678 = vadd.f32 %v661, %v673
        %v679 = vadd.f32 %v662, %v675
        %s680 = sld [smem:[#allocation6 + $0x85]]
        %v681 = vstv %s680
        %v682 = vmul.f32 %v681, %v220
        %v683 = vmul.f32 %v681, %v221
        %v686 = vrot.slane %v682, 1
        %v687 = vrot.slane %v683, 1
        %v688 = vsel %vm268, %v686, %v687
        %689 = vrot.lane.b32.xlu0 %v688, 126
        %v690 = vpop.permute.xlu0 %689
        %691 = vrot.lane.b32.xlu0 %v687, 126
        %v692 = vpop.permute.xlu0 %691
        %v695 = vadd.f32 %v678, %v690
        %v696 = vadd.f32 %v679, %v692
        %s697 = sld [smem:[#allocation6 + $0x86]]
        %v698 = vstv %s697
        %v699 = vmul.f32 %v698, %v220
        %v700 = vmul.f32 %v698, %v221
        %v703 = vrot.slane %v699, 2
        %v704 = vrot.slane %v700, 2
        %v705 = vsel %vm316, %v703, %v704
        %v708 = vadd.f32 %v695, %v705
        %v709 = vadd.f32 %v696, %v704
        %s710 = sld [smem:[#allocation6 + $0x87]]
        %v711 = vstv %s710
        %v712 = vmul.f32 %v711, %v220
        %v713 = vmul.f32 %v711, %v221
        %v716 = vrot.slane %v712, 2
        %v717 = vrot.slane %v713, 2
        %v718 = vsel %vm316, %v716, %v717
        %719 = vrot.lane.b32.xlu0 %v718, 127
        %v720 = vpop.permute.xlu0 %719
        %721 = vrot.lane.b32.xlu0 %v717, 127
        %v722 = vpop.permute.xlu0 %721
        %v725 = vadd.f32 %v708, %v720
        %v726 = vadd.f32 %v709, %v722
        %s727 = sld [smem:[#allocation6 + $0x88]]
        %v728 = vstv %s727
        %v729 = vmul.f32 %v728, %v220
        %v730 = vmul.f32 %v728, %v221
        %v733 = vrot.slane %v729, 2
        %v734 = vrot.slane %v730, 2
        %v735 = vsel %vm316, %v733, %v734
        %736 = vrot.lane.b32.xlu0 %v735, 126
        %v737 = vpop.permute.xlu0 %736
        %738 = vrot.lane.b32.xlu0 %v734, 126
        %v739 = vpop.permute.xlu0 %738
        %v742 = vadd.f32 %v725, %v737
        %v743 = vadd.f32 %v726, %v739
        %s744 = sld [smem:[#allocation6 + $0x89]]
        %v745 = vstv %s744
        %v746 = vmul.f32 %v745, %v222
        %v747 = vmul.f32 %v745, %v223
        %v748 = vadd.f32 %v742, %v746
        %v749 = vadd.f32 %v743, %v747
        %s750 = sld [smem:[#allocation6 + $0x8a]]
        %v751 = vstv %s750
        %v752 = vmul.f32 %v751, %v222
        %v753 = vmul.f32 %v751, %v223
        %756 = vrot.lane.b32.xlu0 %v752, 127
        %v757 = vpop.permute.xlu0 %756
        %758 = vrot.lane.b32.xlu0 %v753, 127
        %v759 = vpop.permute.xlu0 %758
        %v762 = vadd.f32 %v748, %v757
        %v763 = vadd.f32 %v749, %v759
        %s764 = sld [smem:[#allocation6 + $0x8b]]
        %v765 = vstv %s764
        %v766 = vmul.f32 %v765, %v222
        %v767 = vmul.f32 %v765, %v223
        %770 = vrot.lane.b32.xlu0 %v766, 126
        %v771 = vpop.permute.xlu0 %770
        %772 = vrot.lane.b32.xlu0 %v767, 126
        %v773 = vpop.permute.xlu0 %772
        %v776 = vadd.f32 %v762, %v771
        %v777 = vadd.f32 %v763, %v773
        %s778 = sld [smem:[#allocation6 + $0x8c]]
        %v779 = vstv %s778
        %v780 = vmul.f32 %v779, %v222
        %v781 = vmul.f32 %v779, %v223
        %v784 = vrot.slane %v780, 1
        %v785 = vrot.slane %v781, 1
        %v786 = vsel %vm268, %v784, %v785
        %v789 = vadd.f32 %v776, %v786
        %v790 = vadd.f32 %v777, %v785
        %s791 = sld [smem:[#allocation6 + $0x8d]]
        %v792 = vstv %s791
        %v793 = vmul.f32 %v792, %v222
        %v794 = vmul.f32 %v792, %v223
        %v797 = vrot.slane %v793, 1
        %v798 = vrot.slane %v794, 1
        %v799 = vsel %vm268, %v797, %v798
        %800 = vrot.lane.b32.xlu0 %v799, 127
        %v801 = vpop.permute.xlu0 %800
        %802 = vrot.lane.b32.xlu0 %v798, 127
        %v803 = vpop.permute.xlu0 %802
        %v806 = vadd.f32 %v789, %v801
        %v807 = vadd.f32 %v790, %v803
        %s808 = sld [smem:[#allocation6 + $0x8e]]
        %v809 = vstv %s808
        %v810 = vmul.f32 %v809, %v222
        %v811 = vmul.f32 %v809, %v223
        %v814 = vrot.slane %v810, 1
        %v815 = vrot.slane %v811, 1
        %v816 = vsel %vm268, %v814, %v815
        %817 = vrot.lane.b32.xlu0 %v816, 126
        %v818 = vpop.permute.xlu0 %817
        %819 = vrot.lane.b32.xlu0 %v815, 126
        %v820 = vpop.permute.xlu0 %819
        %v823 = vadd.f32 %v806, %v818
        %v824 = vadd.f32 %v807, %v820
        %s825 = sld [smem:[#allocation6 + $0x8f]]
        %v826 = vstv %s825
        %v827 = vmul.f32 %v826, %v222
        %v828 = vmul.f32 %v826, %v223
        %v831 = vrot.slane %v827, 2
        %v832 = vrot.slane %v828, 2
        %v833 = vsel %vm316, %v831, %v832
        %v836 = vadd.f32 %v823, %v833
        %v837 = vadd.f32 %v824, %v832
        %s838 = sld [smem:[#allocation6 + $0x90]]
        %v839 = vstv %s838
        %v840 = vmul.f32 %v839, %v222
        %v841 = vmul.f32 %v839, %v223
        %v844 = vrot.slane %v840, 2
        %v845 = vrot.slane %v841, 2
        %v846 = vsel %vm316, %v844, %v845
        %847 = vrot.lane.b32.xlu0 %v846, 127
        %v848 = vpop.permute.xlu0 %847
        %849 = vrot.lane.b32.xlu0 %v845, 127
        %v850 = vpop.permute.xlu0 %849
        %v853 = vadd.f32 %v836, %v848
        %v854 = vadd.f32 %v837, %v850
        %s855 = sld [smem:[#allocation6 + $0x91]]
        %v856 = vstv %s855
        %v857 = vmul.f32 %v856, %v222
        %v858 = vmul.f32 %v856, %v223
        %v861 = vrot.slane %v857, 2
        %v862 = vrot.slane %v858, 2
        %v863 = vsel %vm316, %v861, %v862
        %864 = vrot.lane.b32.xlu0 %v863, 126
        %v865 = vpop.permute.xlu0 %864
        %866 = vrot.lane.b32.xlu0 %v862, 126
        %v867 = vpop.permute.xlu0 %866
        %v870 = vadd.f32 %v853, %v865
        %v871 = vadd.f32 %v854, %v867
        %s872 = sld [smem:[#allocation6 + $0x92]]
        %v873 = vstv %s872
        %v874 = vmul.f32 %v873, %v224
        %v875 = vmul.f32 %v873, %v225
        %v876 = vadd.f32 %v870, %v874
        %v877 = vadd.f32 %v871, %v875
        %s878 = sld [smem:[#allocation6 + $0x93]]
        %v879 = vstv %s878
        %v880 = vmul.f32 %v879, %v224
        %v881 = vmul.f32 %v879, %v225
        %884 = vrot.lane.b32.xlu0 %v880, 127
        %v885 = vpop.permute.xlu0 %884
        %886 = vrot.lane.b32.xlu0 %v881, 127
        %v887 = vpop.permute.xlu0 %886
        %v890 = vadd.f32 %v876, %v885
        %v891 = vadd.f32 %v877, %v887
        %s892 = sld [smem:[#allocation6 + $0x94]]
        %v893 = vstv %s892
        %v894 = vmul.f32 %v893, %v224
        %v895 = vmul.f32 %v893, %v225
        %898 = vrot.lane.b32.xlu0 %v894, 126
        %v899 = vpop.permute.xlu0 %898
        %900 = vrot.lane.b32.xlu0 %v895, 126
        %v901 = vpop.permute.xlu0 %900
        %v904 = vadd.f32 %v890, %v899
        %v905 = vadd.f32 %v891, %v901
        %s906 = sld [smem:[#allocation6 + $0x95]]
        %v907 = vstv %s906
        %v908 = vmul.f32 %v907, %v224
        %v909 = vmul.f32 %v907, %v225
        %v912 = vrot.slane %v908, 1
        %v913 = vrot.slane %v909, 1
        %v914 = vsel %vm268, %v912, %v913
        %v917 = vadd.f32 %v904, %v914
        %v918 = vadd.f32 %v905, %v913
        %s919 = sld [smem:[#allocation6 + $0x96]]
        %v920 = vstv %s919
        %v921 = vmul.f32 %v920, %v224
        %v922 = vmul.f32 %v920, %v225
        %v925 = vrot.slane %v921, 1
        %v926 = vrot.slane %v922, 1
        %v927 = vsel %vm268, %v925, %v926
        %928 = vrot.lane.b32.xlu0 %v927, 127
        %v929 = vpop.permute.xlu0 %928
        %930 = vrot.lane.b32.xlu0 %v926, 127
        %v931 = vpop.permute.xlu0 %930
        %v934 = vadd.f32 %v917, %v929
        %v935 = vadd.f32 %v918, %v931
        %s936 = sld [smem:[#allocation6 + $0x97]]
        %v937 = vstv %s936
        %v938 = vmul.f32 %v937, %v224
        %v939 = vmul.f32 %v937, %v225
        %v942 = vrot.slane %v938, 1
        %v943 = vrot.slane %v939, 1
        %v944 = vsel %vm268, %v942, %v943
        %945 = vrot.lane.b32.xlu0 %v944, 126
        %v946 = vpop.permute.xlu0 %945
        %947 = vrot.lane.b32.xlu0 %v943, 126
        %v948 = vpop.permute.xlu0 %947
        %v951 = vadd.f32 %v934, %v946
        %v952 = vadd.f32 %v935, %v948
        %s953 = sld [smem:[#allocation6 + $0x98]]
        %v954 = vstv %s953
        %v955 = vmul.f32 %v954, %v224
        %v956 = vmul.f32 %v954, %v225
        %v959 = vrot.slane %v955, 2
        %v960 = vrot.slane %v956, 2
        %v961 = vsel %vm316, %v959, %v960
        %v964 = vadd.f32 %v951, %v961
        %v965 = vadd.f32 %v952, %v960
        %s966 = sld [smem:[#allocation6 + $0x99]]
        %v967 = vstv %s966
        %v968 = vmul.f32 %v967, %v224
        %v969 = vmul.f32 %v967, %v225
        %v972 = vrot.slane %v968, 2
        %v973 = vrot.slane %v969, 2
        %v974 = vsel %vm316, %v972, %v973
        %975 = vrot.lane.b32.xlu0 %v974, 127
        %v976 = vpop.permute.xlu0 %975
        %977 = vrot.lane.b32.xlu0 %v973, 127
        %v978 = vpop.permute.xlu0 %977
        %v981 = vadd.f32 %v964, %v976
        %v982 = vadd.f32 %v965, %v978
        %s983 = sld [smem:[#allocation6 + $0x9a]]
        %v984 = vstv %s983
        %v985 = vmul.f32 %v984, %v224
        %v986 = vmul.f32 %v984, %v225
        %v989 = vrot.slane %v985, 2
        %v990 = vrot.slane %v986, 2
        %v991 = vsel %vm316, %v989, %v990
        %992 = vrot.lane.b32.xlu0 %v991, 126
        %v993 = vpop.permute.xlu0 %992
        %994 = vrot.lane.b32.xlu0 %v990, 126
        %v995 = vpop.permute.xlu0 %994
        %v998 = vadd.f32 %v981, %v993
        %v999 = vadd.f32 %v982, %v995
        %s1000 = sld [smem:[#allocation7 + $0x2]]
        %v1001 = vstv %s1000
        %s1002 = sld [smem:[#allocation6 + $0x100]]
        %v1003 = vstv %s1002
        %v1004 = vmul.f32 %v1003, %v220
        %v1005 = vmul.f32 %v1003, %v221
        %v1006 = vadd.f32 %v1001, %v1004
        %v1007 = vadd.f32 %v1001, %v1005
        %s1008 = sld [smem:[#allocation6 + $0x101]]
        %v1009 = vstv %s1008
        %v1010 = vmul.f32 %v1009, %v220
        %v1011 = vmul.f32 %v1009, %v221
        %1014 = vrot.lane.b32.xlu0 %v1010, 127
        %v1015 = vpop.permute.xlu0 %1014
        %1016 = vrot.lane.b32.xlu0 %v1011, 127
        %v1017 = vpop.permute.xlu0 %1016
        %v1020 = vadd.f32 %v1006, %v1015
        %v1021 = vadd.f32 %v1007, %v1017
        %s1022 = sld [smem:[#allocation6 + $0x102]]
        %v1023 = vstv %s1022
        %v1024 = vmul.f32 %v1023, %v220
        %v1025 = vmul.f32 %v1023, %v221
        %1028 = vrot.lane.b32.xlu0 %v1024, 126
        %v1029 = vpop.permute.xlu0 %1028
        %1030 = vrot.lane.b32.xlu0 %v1025, 126
        %v1031 = vpop.permute.xlu0 %1030
        %v1034 = vadd.f32 %v1020, %v1029
        %v1035 = vadd.f32 %v1021, %v1031
        %s1036 = sld [smem:[#allocation6 + $0x103]]
        %v1037 = vstv %s1036
        %v1038 = vmul.f32 %v1037, %v220
        %v1039 = vmul.f32 %v1037, %v221
        %v1042 = vrot.slane %v1038, 1
        %v1043 = vrot.slane %v1039, 1
        %v1044 = vsel %vm268, %v1042, %v1043
        %v1047 = vadd.f32 %v1034, %v1044
        %v1048 = vadd.f32 %v1035, %v1043
        %s1049 = sld [smem:[#allocation6 + $0x104]]
        %v1050 = vstv %s1049
        %v1051 = vmul.f32 %v1050, %v220
        %v1052 = vmul.f32 %v1050, %v221
        %v1055 = vrot.slane %v1051, 1
        %v1056 = vrot.slane %v1052, 1
        %v1057 = vsel %vm268, %v1055, %v1056
        %1058 = vrot.lane.b32.xlu0 %v1057, 127
        %v1059 = vpop.permute.xlu0 %1058
        %1060 = vrot.lane.b32.xlu0 %v1056, 127
        %v1061 = vpop.permute.xlu0 %1060
        %v1064 = vadd.f32 %v1047, %v1059
        %v1065 = vadd.f32 %v1048, %v1061
        %s1066 = sld [smem:[#allocation6 + $0x105]]
        %v1067 = vstv %s1066
        %v1068 = vmul.f32 %v1067, %v220
        %v1069 = vmul.f32 %v1067, %v221
        %v1072 = vrot.slane %v1068, 1
        %v1073 = vrot.slane %v1069, 1
        %v1074 = vsel %vm268, %v1072, %v1073
        %1075 = vrot.lane.b32.xlu0 %v1074, 126
        %v1076 = vpop.permute.xlu0 %1075
        %1077 = vrot.lane.b32.xlu0 %v1073, 126
        %v1078 = vpop.permute.xlu0 %1077
        %v1081 = vadd.f32 %v1064, %v1076
        %v1082 = vadd.f32 %v1065, %v1078
        %s1083 = sld [smem:[#allocation6 + $0x106]]
        %v1084 = vstv %s1083
        %v1085 = vmul.f32 %v1084, %v220
        %v1086 = vmul.f32 %v1084, %v221
        %v1089 = vrot.slane %v1085, 2
        %v1090 = vrot.slane %v1086, 2
        %v1091 = vsel %vm316, %v1089, %v1090
        %v1094 = vadd.f32 %v1081, %v1091
        %v1095 = vadd.f32 %v1082, %v1090
        %s1096 = sld [smem:[#allocation6 + $0x107]]
        %v1097 = vstv %s1096
        %v1098 = vmul.f32 %v1097, %v220
        %v1099 = vmul.f32 %v1097, %v221
        %v1102 = vrot.slane %v1098, 2
        %v1103 = vrot.slane %v1099, 2
        %v1104 = vsel %vm316, %v1102, %v1103
        %1105 = vrot.lane.b32.xlu0 %v1104, 127
        %v1106 = vpop.permute.xlu0 %1105
        %1107 = vrot.lane.b32.xlu0 %v1103, 127
        %v1108 = vpop.permute.xlu0 %1107
        %v1111 = vadd.f32 %v1094, %v1106
        %v1112 = vadd.f32 %v1095, %v1108
        %s1113 = sld [smem:[#allocation6 + $0x108]]
        %v1114 = vstv %s1113
        %v1115 = vmul.f32 %v1114, %v220
        %v1116 = vmul.f32 %v1114, %v221
        %v1119 = vrot.slane %v1115, 2
        %v1120 = vrot.slane %v1116, 2
        %v1121 = vsel %vm316, %v1119, %v1120
        %1122 = vrot.lane.b32.xlu0 %v1121, 126
        %v1123 = vpop.permute.xlu0 %1122
        %1124 = vrot.lane.b32.xlu0 %v1120, 126
        %v1125 = vpop.permute.xlu0 %1124
        %v1128 = vadd.f32 %v1111, %v1123
        %v1129 = vadd.f32 %v1112, %v1125
        %s1130 = sld [smem:[#allocation6 + $0x109]]
        %v1131 = vstv %s1130
        %v1132 = vmul.f32 %v1131, %v222
        %v1133 = vmul.f32 %v1131, %v223
        %v1134 = vadd.f32 %v1128, %v1132
        %v1135 = vadd.f32 %v1129, %v1133
        %s1136 = sld [smem:[#allocation6 + $0x10a]]
        %v1137 = vstv %s1136
        %v1138 = vmul.f32 %v1137, %v222
        %v1139 = vmul.f32 %v1137, %v223
        %1142 = vrot.lane.b32.xlu0 %v1138, 127
        %v1143 = vpop.permute.xlu0 %1142
        %1144 = vrot.lane.b32.xlu0 %v1139, 127
        %v1145 = vpop.permute.xlu0 %1144
        %v1148 = vadd.f32 %v1134, %v1143
        %v1149 = vadd.f32 %v1135, %v1145
        %s1150 = sld [smem:[#allocation6 + $0x10b]]
        %v1151 = vstv %s1150
        %v1152 = vmul.f32 %v1151, %v222
        %v1153 = vmul.f32 %v1151, %v223
        %1156 = vrot.lane.b32.xlu0 %v1152, 126
        %v1157 = vpop.permute.xlu0 %1156
        %1158 = vrot.lane.b32.xlu0 %v1153, 126
        %v1159 = vpop.permute.xlu0 %1158
        %v1162 = vadd.f32 %v1148, %v1157
        %v1163 = vadd.f32 %v1149, %v1159
        %s1164 = sld [smem:[#allocation6 + $0x10c]]
        %v1165 = vstv %s1164
        %v1166 = vmul.f32 %v1165, %v222
        %v1167 = vmul.f32 %v1165, %v223
        %v1170 = vrot.slane %v1166, 1
        %v1171 = vrot.slane %v1167, 1
        %v1172 = vsel %vm268, %v1170, %v1171
        %v1175 = vadd.f32 %v1162, %v1172
        %v1176 = vadd.f32 %v1163, %v1171
        %s1177 = sld [smem:[#allocation6 + $0x10d]]
        %v1178 = vstv %s1177
        %v1179 = vmul.f32 %v1178, %v222
        %v1180 = vmul.f32 %v1178, %v223
        %v1183 = vrot.slane %v1179, 1
        %v1184 = vrot.slane %v1180, 1
        %v1185 = vsel %vm268, %v1183, %v1184
        %1186 = vrot.lane.b32.xlu0 %v1185, 127
        %v1187 = vpop.permute.xlu0 %1186
        %1188 = vrot.lane.b32.xlu0 %v1184, 127
        %v1189 = vpop.permute.xlu0 %1188
        %v1192 = vadd.f32 %v1175, %v1187
        %v1193 = vadd.f32 %v1176, %v1189
        %s1194 = sld [smem:[#allocation6 + $0x10e]]
        %v1195 = vstv %s1194
        %v1196 = vmul.f32 %v1195, %v222
        %v1197 = vmul.f32 %v1195, %v223
        %v1200 = vrot.slane %v1196, 1
        %v1201 = vrot.slane %v1197, 1
        %v1202 = vsel %vm268, %v1200, %v1201
        %1203 = vrot.lane.b32.xlu0 %v1202, 126
        %v1204 = vpop.permute.xlu0 %1203
        %1205 = vrot.lane.b32.xlu0 %v1201, 126
        %v1206 = vpop.permute.xlu0 %1205
        %v1209 = vadd.f32 %v1192, %v1204
        %v1210 = vadd.f32 %v1193, %v1206
        %s1211 = sld [smem:[#allocation6 + $0x10f]]
        %v1212 = vstv %s1211
        %v1213 = vmul.f32 %v1212, %v222
        %v1214 = vmul.f32 %v1212, %v223
        %v1217 = vrot.slane %v1213, 2
        %v1218 = vrot.slane %v1214, 2
        %v1219 = vsel %vm316, %v1217, %v1218
        %v1222 = vadd.f32 %v1209, %v1219
        %v1223 = vadd.f32 %v1210, %v1218
        %s1224 = sld [smem:[#allocation6 + $0x110]]
        %v1225 = vstv %s1224
        %v1226 = vmul.f32 %v1225, %v222
        %v1227 = vmul.f32 %v1225, %v223
        %v1230 = vrot.slane %v1226, 2
        %v1231 = vrot.slane %v1227, 2
        %v1232 = vsel %vm316, %v1230, %v1231
        %1233 = vrot.lane.b32.xlu0 %v1232, 127
        %v1234 = vpop.permute.xlu0 %1233
        %1235 = vrot.lane.b32.xlu0 %v1231, 127
        %v1236 = vpop.permute.xlu0 %1235
        %v1239 = vadd.f32 %v1222, %v1234
        %v1240 = vadd.f32 %v1223, %v1236
        %s1241 = sld [smem:[#allocation6 + $0x111]]
        %v1242 = vstv %s1241
        %v1243 = vmul.f32 %v1242, %v222
        %v1244 = vmul.f32 %v1242, %v223
        %v1247 = vrot.slane %v1243, 2
        %v1248 = vrot.slane %v1244, 2
        %v1249 = vsel %vm316, %v1247, %v1248
        %1250 = vrot.lane.b32.xlu0 %v1249, 126
        %v1251 = vpop.permute.xlu0 %1250
        %1252 = vrot.lane.b32.xlu0 %v1248, 126
        %v1253 = vpop.permute.xlu0 %1252
        %v1256 = vadd.f32 %v1239, %v1251
        %v1257 = vadd.f32 %v1240, %v1253
        %s1258 = sld [smem:[#allocation6 + $0x112]]
        %v1259 = vstv %s1258
        %v1260 = vmul.f32 %v1259, %v224
        %v1261 = vmul.f32 %v1259, %v225
        %v1262 = vadd.f32 %v1256, %v1260
        %v1263 = vadd.f32 %v1257, %v1261
        %s1264 = sld [smem:[#allocation6 + $0x113]]
        %v1265 = vstv %s1264
        %v1266 = vmul.f32 %v1265, %v224
        %v1267 = vmul.f32 %v1265, %v225
        %1270 = vrot.lane.b32.xlu0 %v1266, 127
        %v1271 = vpop.permute.xlu0 %1270
        %1272 = vrot.lane.b32.xlu0 %v1267, 127
        %v1273 = vpop.permute.xlu0 %1272
        %v1276 = vadd.f32 %v1262, %v1271
        %v1277 = vadd.f32 %v1263, %v1273
        %s1278 = sld [smem:[#allocation6 + $0x114]]
        %v1279 = vstv %s1278
        %v1280 = vmul.f32 %v1279, %v224
        %v1281 = vmul.f32 %v1279, %v225
        %1284 = vrot.lane.b32.xlu0 %v1280, 126
        %v1285 = vpop.permute.xlu0 %1284
        %1286 = vrot.lane.b32.xlu0 %v1281, 126
        %v1287 = vpop.permute.xlu0 %1286
        %v1290 = vadd.f32 %v1276, %v1285
        %v1291 = vadd.f32 %v1277, %v1287
        %s1292 = sld [smem:[#allocation6 + $0x115]]
        %v1293 = vstv %s1292
        %v1294 = vmul.f32 %v1293, %v224
        %v1295 = vmul.f32 %v1293, %v225
        %v1298 = vrot.slane %v1294, 1
        %v1299 = vrot.slane %v1295, 1
        %v1300 = vsel %vm268, %v1298, %v1299
        %v1303 = vadd.f32 %v1290, %v1300
        %v1304 = vadd.f32 %v1291, %v1299
        %s1305 = sld [smem:[#allocation6 + $0x116]]
        %v1306 = vstv %s1305
        %v1307 = vmul.f32 %v1306, %v224
        %v1308 = vmul.f32 %v1306, %v225
        %v1311 = vrot.slane %v1307, 1
        %v1312 = vrot.slane %v1308, 1
        %v1313 = vsel %vm268, %v1311, %v1312
        %1314 = vrot.lane.b32.xlu0 %v1313, 127
        %v1315 = vpop.permute.xlu0 %1314
        %1316 = vrot.lane.b32.xlu0 %v1312, 127
        %v1317 = vpop.permute.xlu0 %1316
        %v1320 = vadd.f32 %v1303, %v1315
        %v1321 = vadd.f32 %v1304, %v1317
        %s1322 = sld [smem:[#allocation6 + $0x117]]
        %v1323 = vstv %s1322
        %v1324 = vmul.f32 %v1323, %v224
        %v1325 = vmul.f32 %v1323, %v225
        %v1328 = vrot.slane %v1324, 1
        %v1329 = vrot.slane %v1325, 1
        %v1330 = vsel %vm268, %v1328, %v1329
        %1331 = vrot.lane.b32.xlu0 %v1330, 126
        %v1332 = vpop.permute.xlu0 %1331
        %1333 = vrot.lane.b32.xlu0 %v1329, 126
        %v1334 = vpop.permute.xlu0 %1333
        %v1337 = vadd.f32 %v1320, %v1332
        %v1338 = vadd.f32 %v1321, %v1334
        %s1339 = sld [smem:[#allocation6 + $0x118]]
        %v1340 = vstv %s1339
        %v1341 = vmul.f32 %v1340, %v224
        %v1342 = vmul.f32 %v1340, %v225
        %v1345 = vrot.slane %v1341, 2
        %v1346 = vrot.slane %v1342, 2
        %v1347 = vsel %vm316, %v1345, %v1346
        %v1350 = vadd.f32 %v1337, %v1347
        %v1351 = vadd.f32 %v1338, %v1346
        %s1352 = sld [smem:[#allocation6 + $0x119]]
        %v1353 = vstv %s1352
        %v1354 = vmul.f32 %v1353, %v224
        %v1355 = vmul.f32 %v1353, %v225
        %v1358 = vrot.slane %v1354, 2
        %v1359 = vrot.slane %v1355, 2
        %v1360 = vsel %vm316, %v1358, %v1359
        %1361 = vrot.lane.b32.xlu0 %v1360, 127
        %v1362 = vpop.permute.xlu0 %1361
        %1363 = vrot.lane.b32.xlu0 %v1359, 127
        %v1364 = vpop.permute.xlu0 %1363
        %v1367 = vadd.f32 %v1350, %v1362
        %v1368 = vadd.f32 %v1351, %v1364
        %s1369 = sld [smem:[#allocation6 + $0x11a]]
        %v1370 = vstv %s1369
        %v1371 = vmul.f32 %v1370, %v224
        %v1372 = vmul.f32 %v1370, %v225
        %v1375 = vrot.slane %v1371, 2
        %v1376 = vrot.slane %v1372, 2
        %v1377 = vsel %vm316, %v1375, %v1376
        %1378 = vrot.lane.b32.xlu0 %v1377, 126
        %v1379 = vpop.permute.xlu0 %1378
        %1380 = vrot.lane.b32.xlu0 %v1376, 126
        %v1381 = vpop.permute.xlu0 %1380
        %v1384 = vadd.f32 %v1367, %v1379
        %v1385 = vadd.f32 %v1368, %v1381
        %s1386 = sld [smem:[#allocation7 + $0x3]]
        %v1387 = vstv %s1386
        %s1388 = sld [smem:[#allocation6 + $0x180]]
        %v1389 = vstv %s1388
        %v1390 = vmul.f32 %v1389, %v220
        %v1391 = vmul.f32 %v1389, %v221
        %v1392 = vadd.f32 %v1387, %v1390
        %v1393 = vadd.f32 %v1387, %v1391
        %s1394 = sld [smem:[#allocation6 + $0x181]]
        %v1395 = vstv %s1394
        %v1396 = vmul.f32 %v1395, %v220
        %v1397 = vmul.f32 %v1395, %v221
        %1400 = vrot.lane.b32.xlu0 %v1396, 127
        %v1401 = vpop.permute.xlu0 %1400
        %1402 = vrot.lane.b32.xlu0 %v1397, 127
        %v1403 = vpop.permute.xlu0 %1402
        %v1406 = vadd.f32 %v1392, %v1401
        %v1407 = vadd.f32 %v1393, %v1403
        %s1408 = sld [smem:[#allocation6 + $0x182]]
        %v1409 = vstv %s1408
        %v1410 = vmul.f32 %v1409, %v220
        %v1411 = vmul.f32 %v1409, %v221
        %1414 = vrot.lane.b32.xlu0 %v1410, 126
        %v1415 = vpop.permute.xlu0 %1414
        %1416 = vrot.lane.b32.xlu0 %v1411, 126
        %v1417 = vpop.permute.xlu0 %1416
        %v1420 = vadd.f32 %v1406, %v1415
        %v1421 = vadd.f32 %v1407, %v1417
        %s1422 = sld [smem:[#allocation6 + $0x183]]
        %v1423 = vstv %s1422
        %v1424 = vmul.f32 %v1423, %v220
        %v1425 = vmul.f32 %v1423, %v221
        %v1428 = vrot.slane %v1424, 1
        %v1429 = vrot.slane %v1425, 1
        %v1430 = vsel %vm268, %v1428, %v1429
        %v1433 = vadd.f32 %v1420, %v1430
        %v1434 = vadd.f32 %v1421, %v1429
        %s1435 = sld [smem:[#allocation6 + $0x184]]
        %v1436 = vstv %s1435
        %v1437 = vmul.f32 %v1436, %v220
        %v1438 = vmul.f32 %v1436, %v221
        %v1441 = vrot.slane %v1437, 1
        %v1442 = vrot.slane %v1438, 1
        %v1443 = vsel %vm268, %v1441, %v1442
        %1444 = vrot.lane.b32.xlu0 %v1443, 127
        %v1445 = vpop.permute.xlu0 %1444
        %1446 = vrot.lane.b32.xlu0 %v1442, 127
        %v1447 = vpop.permute.xlu0 %1446
        %v1450 = vadd.f32 %v1433, %v1445
        %v1451 = vadd.f32 %v1434, %v1447
        %s1452 = sld [smem:[#allocation6 + $0x185]]
        %v1453 = vstv %s1452
        %v1454 = vmul.f32 %v1453, %v220
        %v1455 = vmul.f32 %v1453, %v221
        %v1458 = vrot.slane %v1454, 1
        %v1459 = vrot.slane %v1455, 1
        %v1460 = vsel %vm268, %v1458, %v1459
        %1461 = vrot.lane.b32.xlu0 %v1460, 126
        %v1462 = vpop.permute.xlu0 %1461
        %1463 = vrot.lane.b32.xlu0 %v1459, 126
        %v1464 = vpop.permute.xlu0 %1463
        %v1467 = vadd.f32 %v1450, %v1462
        %v1468 = vadd.f32 %v1451, %v1464
        %s1469 = sld [smem:[#allocation6 + $0x186]]
        %v1470 = vstv %s1469
        %v1471 = vmul.f32 %v1470, %v220
        %v1472 = vmul.f32 %v1470, %v221
        %v1475 = vrot.slane %v1471, 2
        %v1476 = vrot.slane %v1472, 2
        %v1477 = vsel %vm316, %v1475, %v1476
        %v1480 = vadd.f32 %v1467, %v1477
        %v1481 = vadd.f32 %v1468, %v1476
        %s1482 = sld [smem:[#allocation6 + $0x187]]
        %v1483 = vstv %s1482
        %v1484 = vmul.f32 %v1483, %v220
        %v1485 = vmul.f32 %v1483, %v221
        %v1488 = vrot.slane %v1484, 2
        %v1489 = vrot.slane %v1485, 2
        %v1490 = vsel %vm316, %v1488, %v1489
        %1491 = vrot.lane.b32.xlu0 %v1490, 127
        %v1492 = vpop.permute.xlu0 %1491
        %1493 = vrot.lane.b32.xlu0 %v1489, 127
        %v1494 = vpop.permute.xlu0 %1493
        %v1497 = vadd.f32 %v1480, %v1492
        %v1498 = vadd.f32 %v1481, %v1494
        %s1499 = sld [smem:[#allocation6 + $0x188]]
        %v1500 = vstv %s1499
        %v1501 = vmul.f32 %v1500, %v220
        %v1502 = vmul.f32 %v1500, %v221
        %v1505 = vrot.slane %v1501, 2
        %v1506 = vrot.slane %v1502, 2
        %v1507 = vsel %vm316, %v1505, %v1506
        %1508 = vrot.lane.b32.xlu0 %v1507, 126
        %v1509 = vpop.permute.xlu0 %1508
        %1510 = vrot.lane.b32.xlu0 %v1506, 126
        %v1511 = vpop.permute.xlu0 %1510
        %v1514 = vadd.f32 %v1497, %v1509
        %v1515 = vadd.f32 %v1498, %v1511
        %s1516 = sld [smem:[#allocation6 + $0x189]]
        %v1517 = vstv %s1516
        %v1518 = vmul.f32 %v1517, %v222
        %v1519 = vmul.f32 %v1517, %v223
        %v1520 = vadd.f32 %v1514, %v1518
        %v1521 = vadd.f32 %v1515, %v1519
        %s1522 = sld [smem:[#allocation6 + $0x18a]]
        %v1523 = vstv %s1522
        %v1524 = vmul.f32 %v1523, %v222
        %v1525 = vmul.f32 %v1523, %v223
        %1528 = vrot.lane.b32.xlu0 %v1524, 127
        %v1529 = vpop.permute.xlu0 %1528
        %1530 = vrot.lane.b32.xlu0 %v1525, 127
        %v1531 = vpop.permute.xlu0 %1530
        %v1534 = vadd.f32 %v1520, %v1529
        %v1535 = vadd.f32 %v1521, %v1531
        %s1536 = sld [smem:[#allocation6 + $0x18b]]
        %v1537 = vstv %s1536
        %v1538 = vmul.f32 %v1537, %v222
        %v1539 = vmul.f32 %v1537, %v223
        %1542 = vrot.lane.b32.xlu0 %v1538, 126
        %v1543 = vpop.permute.xlu0 %1542
        %1544 = vrot.lane.b32.xlu0 %v1539, 126
        %v1545 = vpop.permute.xlu0 %1544
        %v1548 = vadd.f32 %v1534, %v1543
        %v1549 = vadd.f32 %v1535, %v1545
        %s1550 = sld [smem:[#allocation6 + $0x18c]]
        %v1551 = vstv %s1550
        %v1552 = vmul.f32 %v1551, %v222
        %v1553 = vmul.f32 %v1551, %v223
        %v1556 = vrot.slane %v1552, 1
        %v1557 = vrot.slane %v1553, 1
        %v1558 = vsel %vm268, %v1556, %v1557
        %v1561 = vadd.f32 %v1548, %v1558
        %v1562 = vadd.f32 %v1549, %v1557
        %s1563 = sld [smem:[#allocation6 + $0x18d]]
        %v1564 = vstv %s1563
        %v1565 = vmul.f32 %v1564, %v222
        %v1566 = vmul.f32 %v1564, %v223
        %v1569 = vrot.slane %v1565, 1
        %v1570 = vrot.slane %v1566, 1
        %v1571 = vsel %vm268, %v1569, %v1570
        %1572 = vrot.lane.b32.xlu0 %v1571, 127
        %v1573 = vpop.permute.xlu0 %1572
        %1574 = vrot.lane.b32.xlu0 %v1570, 127
        %v1575 = vpop.permute.xlu0 %1574
        %v1578 = vadd.f32 %v1561, %v1573
        %v1579 = vadd.f32 %v1562, %v1575
        %s1580 = sld [smem:[#allocation6 + $0x18e]]
        %v1581 = vstv %s1580
        %v1582 = vmul.f32 %v1581, %v222
        %v1583 = vmul.f32 %v1581, %v223
        %v1586 = vrot.slane %v1582, 1
        %v1587 = vrot.slane %v1583, 1
        %v1588 = vsel %vm268, %v1586, %v1587
        %1589 = vrot.lane.b32.xlu0 %v1588, 126
        %v1590 = vpop.permute.xlu0 %1589
        %1591 = vrot.lane.b32.xlu0 %v1587, 126
        %v1592 = vpop.permute.xlu0 %1591
        %v1595 = vadd.f32 %v1578, %v1590
        %v1596 = vadd.f32 %v1579, %v1592
        %s1597 = sld [smem:[#allocation6 + $0x18f]]
        %v1598 = vstv %s1597
        %v1599 = vmul.f32 %v1598, %v222
        %v1600 = vmul.f32 %v1598, %v223
        %v1603 = vrot.slane %v1599, 2
        %v1604 = vrot.slane %v1600, 2
        %v1605 = vsel %vm316, %v1603, %v1604
        %v1608 = vadd.f32 %v1595, %v1605
        %v1609 = vadd.f32 %v1596, %v1604
        %s1610 = sld [smem:[#allocation6 + $0x190]]
        %v1611 = vstv %s1610
        %v1612 = vmul.f32 %v1611, %v222
        %v1613 = vmul.f32 %v1611, %v223
        %v1616 = vrot.slane %v1612, 2
        %v1617 = vrot.slane %v1613, 2
        %v1618 = vsel %vm316, %v1616, %v1617
        %1619 = vrot.lane.b32.xlu0 %v1618, 127
        %v1620 = vpop.permute.xlu0 %1619
        %1621 = vrot.lane.b32.xlu0 %v1617, 127
        %v1622 = vpop.permute.xlu0 %1621
        %v1625 = vadd.f32 %v1608, %v1620
        %v1626 = vadd.f32 %v1609, %v1622
        %s1627 = sld [smem:[#allocation6 + $0x191]]
        %v1628 = vstv %s1627
        %v1629 = vmul.f32 %v1628, %v222
        %v1630 = vmul.f32 %v1628, %v223
        %v1633 = vrot.slane %v1629, 2
        %v1634 = vrot.slane %v1630, 2
        %v1635 = vsel %vm316, %v1633, %v1634
        %1636 = vrot.lane.b32.xlu0 %v1635, 126
        %v1637 = vpop.permute.xlu0 %1636
        %1638 = vrot.lane.b32.xlu0 %v1634, 126
        %v1639 = vpop.permute.xlu0 %1638
        %v1642 = vadd.f32 %v1625, %v1637
        %v1643 = vadd.f32 %v1626, %v1639
        %s1644 = sld [smem:[#allocation6 + $0x192]]
        %v1645 = vstv %s1644
        %v1646 = vmul.f32 %v1645, %v224
        %v1647 = vmul.f32 %v1645, %v225
        %v1648 = vadd.f32 %v1642, %v1646
        %v1649 = vadd.f32 %v1643, %v1647
        %s1650 = sld [smem:[#allocation6 + $0x193]]
        %v1651 = vstv %s1650
        %v1652 = vmul.f32 %v1651, %v224
        %v1653 = vmul.f32 %v1651, %v225
        %1656 = vrot.lane.b32.xlu0 %v1652, 127
        %v1657 = vpop.permute.xlu0 %1656
        %1658 = vrot.lane.b32.xlu0 %v1653, 127
        %v1659 = vpop.permute.xlu0 %1658
        %v1662 = vadd.f32 %v1648, %v1657
        %v1663 = vadd.f32 %v1649, %v1659
        %s1664 = sld [smem:[#allocation6 + $0x194]]
        %v1665 = vstv %s1664
        %v1666 = vmul.f32 %v1665, %v224
        %v1667 = vmul.f32 %v1665, %v225
        %1670 = vrot.lane.b32.xlu0 %v1666, 126
        %v1671 = vpop.permute.xlu0 %1670
        %1672 = vrot.lane.b32.xlu0 %v1667, 126
        %v1673 = vpop.permute.xlu0 %1672
        %v1676 = vadd.f32 %v1662, %v1671
        %v1677 = vadd.f32 %v1663, %v1673
        %s1678 = sld [smem:[#allocation6 + $0x195]]
        %v1679 = vstv %s1678
        %v1680 = vmul.f32 %v1679, %v224
        %v1681 = vmul.f32 %v1679, %v225
        %v1684 = vrot.slane %v1680, 1
        %v1685 = vrot.slane %v1681, 1
        %v1686 = vsel %vm268, %v1684, %v1685
        %v1689 = vadd.f32 %v1676, %v1686
        %v1690 = vadd.f32 %v1677, %v1685
        %s1691 = sld [smem:[#allocation6 + $0x196]]
        %v1692 = vstv %s1691
        %v1693 = vmul.f32 %v1692, %v224
        %v1694 = vmul.f32 %v1692, %v225
        %v1697 = vrot.slane %v1693, 1
        %v1698 = vrot.slane %v1694, 1
        %v1699 = vsel %vm268, %v1697, %v1698
        %1700 = vrot.lane.b32.xlu0 %v1699, 127
        %v1701 = vpop.permute.xlu0 %1700
        %1702 = vrot.lane.b32.xlu0 %v1698, 127
        %v1703 = vpop.permute.xlu0 %1702
        %v1706 = vadd.f32 %v1689, %v1701
        %v1707 = vadd.f32 %v1690, %v1703
        %s1708 = sld [smem:[#allocation6 + $0x197]]
        %v1709 = vstv %s1708
        %v1710 = vmul.f32 %v1709, %v224
        %v1711 = vmul.f32 %v1709, %v225
        %v1714 = vrot.slane %v1710, 1
        %v1715 = vrot.slane %v1711, 1
        %v1716 = vsel %vm268, %v1714, %v1715
        %1717 = vrot.lane.b32.xlu0 %v1716, 126
        %v1718 = vpop.permute.xlu0 %1717
        %1719 = vrot.lane.b32.xlu0 %v1715, 126
        %v1720 = vpop.permute.xlu0 %1719
        %v1723 = vadd.f32 %v1706, %v1718
        %v1724 = vadd.f32 %v1707, %v1720
        %s1725 = sld [smem:[#allocation6 + $0x198]]
        %v1726 = vstv %s1725
        %v1727 = vmul.f32 %v1726, %v224
        %v1728 = vmul.f32 %v1726, %v225
        %v1731 = vrot.slane %v1727, 2
        %v1732 = vrot.slane %v1728, 2
        %v1733 = vsel %vm316, %v1731, %v1732
        %v1736 = vadd.f32 %v1723, %v1733
        %v1737 = vadd.f32 %v1724, %v1732
        %s1738 = sld [smem:[#allocation6 + $0x199]]
        %v1739 = vstv %s1738
        %v1740 = vmul.f32 %v1739, %v224
        %v1741 = vmul.f32 %v1739, %v225
        %v1744 = vrot.slane %v1740, 2
        %v1745 = vrot.slane %v1741, 2
        %v1746 = vsel %vm316, %v1744, %v1745
        %1747 = vrot.lane.b32.xlu0 %v1746, 127
        %v1748 = vpop.permute.xlu0 %1747
        %1749 = vrot.lane.b32.xlu0 %v1745, 127
        %v1750 = vpop.permute.xlu0 %1749
        %v1753 = vadd.f32 %v1736, %v1748
        %v1754 = vadd.f32 %v1737, %v1750
        %s1755 = sld [smem:[#allocation6 + $0x19a]]
        %v1756 = vstv %s1755
        %v1757 = vmul.f32 %v1756, %v224
        %v1758 = vmul.f32 %v1756, %v225
        %v1761 = vrot.slane %v1757, 2
        %v1762 = vrot.slane %v1758, 2
        %v1763 = vsel %vm316, %v1761, %v1762
        %1764 = vrot.lane.b32.xlu0 %v1763, 126
        %v1765 = vpop.permute.xlu0 %1764
        %1766 = vrot.lane.b32.xlu0 %v1762, 126
        %v1767 = vpop.permute.xlu0 %1766
        %v1770 = vadd.f32 %v1753, %v1765
        %v1771 = vadd.f32 %v1754, %v1767
        %s1772 = sld [smem:[#allocation7 + $0x4]]
        %v1773 = vstv %s1772
        %s1774 = sld [smem:[#allocation6 + $0x200]]
        %v1775 = vstv %s1774
        %v1776 = vmul.f32 %v1775, %v220
        %v1777 = vmul.f32 %v1775, %v221
        %v1778 = vadd.f32 %v1773, %v1776
        %v1779 = vadd.f32 %v1773, %v1777
        %s1780 = sld [smem:[#allocation6 + $0x201]]
        %v1781 = vstv %s1780
        %v1782 = vmul.f32 %v1781, %v220
        %v1783 = vmul.f32 %v1781, %v221
        %1786 = vrot.lane.b32.xlu0 %v1782, 127
        %v1787 = vpop.permute.xlu0 %1786
        %1788 = vrot.lane.b32.xlu0 %v1783, 127
        %v1789 = vpop.permute.xlu0 %1788
        %v1792 = vadd.f32 %v1778, %v1787
        %v1793 = vadd.f32 %v1779, %v1789
        %s1794 = sld [smem:[#allocation6 + $0x202]]
        %v1795 = vstv %s1794
        %v1796 = vmul.f32 %v1795, %v220
        %v1797 = vmul.f32 %v1795, %v221
        %1800 = vrot.lane.b32.xlu0 %v1796, 126
        %v1801 = vpop.permute.xlu0 %1800
        %1802 = vrot.lane.b32.xlu0 %v1797, 126
        %v1803 = vpop.permute.xlu0 %1802
        %v1806 = vadd.f32 %v1792, %v1801
        %v1807 = vadd.f32 %v1793, %v1803
        %s1808 = sld [smem:[#allocation6 + $0x203]]
        %v1809 = vstv %s1808
        %v1810 = vmul.f32 %v1809, %v220
        %v1811 = vmul.f32 %v1809, %v221
        %v1814 = vrot.slane %v1810, 1
        %v1815 = vrot.slane %v1811, 1
        %v1816 = vsel %vm268, %v1814, %v1815
        %v1819 = vadd.f32 %v1806, %v1816
        %v1820 = vadd.f32 %v1807, %v1815
        %s1821 = sld [smem:[#allocation6 + $0x204]]
        %v1822 = vstv %s1821
        %v1823 = vmul.f32 %v1822, %v220
        %v1824 = vmul.f32 %v1822, %v221
        %v1827 = vrot.slane %v1823, 1
        %v1828 = vrot.slane %v1824, 1
        %v1829 = vsel %vm268, %v1827, %v1828
        %1830 = vrot.lane.b32.xlu0 %v1829, 127
        %v1831 = vpop.permute.xlu0 %1830
        %1832 = vrot.lane.b32.xlu0 %v1828, 127
        %v1833 = vpop.permute.xlu0 %1832
        %v1836 = vadd.f32 %v1819, %v1831
        %v1837 = vadd.f32 %v1820, %v1833
        %s1838 = sld [smem:[#allocation6 + $0x205]]
        %v1839 = vstv %s1838
        %v1840 = vmul.f32 %v1839, %v220
        %v1841 = vmul.f32 %v1839, %v221
        %v1844 = vrot.slane %v1840, 1
        %v1845 = vrot.slane %v1841, 1
        %v1846 = vsel %vm268, %v1844, %v1845
        %1847 = vrot.lane.b32.xlu0 %v1846, 126
        %v1848 = vpop.permute.xlu0 %1847
        %1849 = vrot.lane.b32.xlu0 %v1845, 126
        %v1850 = vpop.permute.xlu0 %1849
        %v1853 = vadd.f32 %v1836, %v1848
        %v1854 = vadd.f32 %v1837, %v1850
        %s1855 = sld [smem:[#allocation6 + $0x206]]
        %v1856 = vstv %s1855
        %v1857 = vmul.f32 %v1856, %v220
        %v1858 = vmul.f32 %v1856, %v221
        %v1861 = vrot.slane %v1857, 2
        %v1862 = vrot.slane %v1858, 2
        %v1863 = vsel %vm316, %v1861, %v1862
        %v1866 = vadd.f32 %v1853, %v1863
        %v1867 = vadd.f32 %v1854, %v1862
        %s1868 = sld [smem:[#allocation6 + $0x207]]
        %v1869 = vstv %s1868
        %v1870 = vmul.f32 %v1869, %v220
        %v1871 = vmul.f32 %v1869, %v221
        %v1874 = vrot.slane %v1870, 2
        %v1875 = vrot.slane %v1871, 2
        %v1876 = vsel %vm316, %v1874, %v1875
        %1877 = vrot.lane.b32.xlu0 %v1876, 127
        %v1878 = vpop.permute.xlu0 %1877
        %1879 = vrot.lane.b32.xlu0 %v1875, 127
        %v1880 = vpop.permute.xlu0 %1879
        %v1883 = vadd.f32 %v1866, %v1878
        %v1884 = vadd.f32 %v1867, %v1880
        %s1885 = sld [smem:[#allocation6 + $0x208]]
        %v1886 = vstv %s1885
        %v1887 = vmul.f32 %v1886, %v220
        %v1888 = vmul.f32 %v1886, %v221
        %v1891 = vrot.slane %v1887, 2
        %v1892 = vrot.slane %v1888, 2
        %v1893 = vsel %vm316, %v1891, %v1892
        %1894 = vrot.lane.b32.xlu0 %v1893, 126
        %v1895 = vpop.permute.xlu0 %1894
        %1896 = vrot.lane.b32.xlu0 %v1892, 126
        %v1897 = vpop.permute.xlu0 %1896
        %v1900 = vadd.f32 %v1883, %v1895
        %v1901 = vadd.f32 %v1884, %v1897
        %s1902 = sld [smem:[#allocation6 + $0x209]]
        %v1903 = vstv %s1902
        %v1904 = vmul.f32 %v1903, %v222
        %v1905 = vmul.f32 %v1903, %v223
        %v1906 = vadd.f32 %v1900, %v1904
        %v1907 = vadd.f32 %v1901, %v1905
        %s1908 = sld [smem:[#allocation6 + $0x20a]]
        %v1909 = vstv %s1908
        %v1910 = vmul.f32 %v1909, %v222
        %v1911 = vmul.f32 %v1909, %v223
        %1914 = vrot.lane.b32.xlu0 %v1910, 127
        %v1915 = vpop.permute.xlu0 %1914
        %1916 = vrot.lane.b32.xlu0 %v1911, 127
        %v1917 = vpop.permute.xlu0 %1916
        %v1920 = vadd.f32 %v1906, %v1915
        %v1921 = vadd.f32 %v1907, %v1917
        %s1922 = sld [smem:[#allocation6 + $0x20b]]
        %v1923 = vstv %s1922
        %v1924 = vmul.f32 %v1923, %v222
        %v1925 = vmul.f32 %v1923, %v223
        %1928 = vrot.lane.b32.xlu0 %v1924, 126
        %v1929 = vpop.permute.xlu0 %1928
        %1930 = vrot.lane.b32.xlu0 %v1925, 126
        %v1931 = vpop.permute.xlu0 %1930
        %v1934 = vadd.f32 %v1920, %v1929
        %v1935 = vadd.f32 %v1921, %v1931
        %s1936 = sld [smem:[#allocation6 + $0x20c]]
        %v1937 = vstv %s1936
        %v1938 = vmul.f32 %v1937, %v222
        %v1939 = vmul.f32 %v1937, %v223
        %v1942 = vrot.slane %v1938, 1
        %v1943 = vrot.slane %v1939, 1
        %v1944 = vsel %vm268, %v1942, %v1943
        %v1947 = vadd.f32 %v1934, %v1944
        %v1948 = vadd.f32 %v1935, %v1943
        %s1949 = sld [smem:[#allocation6 + $0x20d]]
        %v1950 = vstv %s1949
        %v1951 = vmul.f32 %v1950, %v222
        %v1952 = vmul.f32 %v1950, %v223
        %v1955 = vrot.slane %v1951, 1
        %v1956 = vrot.slane %v1952, 1
        %v1957 = vsel %vm268, %v1955, %v1956
        %1958 = vrot.lane.b32.xlu0 %v1957, 127
        %v1959 = vpop.permute.xlu0 %1958
        %1960 = vrot.lane.b32.xlu0 %v1956, 127
        %v1961 = vpop.permute.xlu0 %1960
        %v1964 = vadd.f32 %v1947, %v1959
        %v1965 = vadd.f32 %v1948, %v1961
        %s1966 = sld [smem:[#allocation6 + $0x20e]]
        %v1967 = vstv %s1966
        %v1968 = vmul.f32 %v1967, %v222
        %v1969 = vmul.f32 %v1967, %v223
        %v1972 = vrot.slane %v1968, 1
        %v1973 = vrot.slane %v1969, 1
        %v1974 = vsel %vm268, %v1972, %v1973
        %1975 = vrot.lane.b32.xlu0 %v1974, 126
        %v1976 = vpop.permute.xlu0 %1975
        %1977 = vrot.lane.b32.xlu0 %v1973, 126
        %v1978 = vpop.permute.xlu0 %1977
        %v1981 = vadd.f32 %v1964, %v1976
        %v1982 = vadd.f32 %v1965, %v1978
        %s1983 = sld [smem:[#allocation6 + $0x20f]]
        %v1984 = vstv %s1983
        %v1985 = vmul.f32 %v1984, %v222
        %v1986 = vmul.f32 %v1984, %v223
        %v1989 = vrot.slane %v1985, 2
        %v1990 = vrot.slane %v1986, 2
        %v1991 = vsel %vm316, %v1989, %v1990
        %v1994 = vadd.f32 %v1981, %v1991
        %v1995 = vadd.f32 %v1982, %v1990
        %s1996 = sld [smem:[#allocation6 + $0x210]]
        %v1997 = vstv %s1996
        %v1998 = vmul.f32 %v1997, %v222
        %v1999 = vmul.f32 %v1997, %v223
        %v2002 = vrot.slane %v1998, 2
        %v2003 = vrot.slane %v1999, 2
        %v2004 = vsel %vm316, %v2002, %v2003
        %2005 = vrot.lane.b32.xlu0 %v2004, 127
        %v2006 = vpop.permute.xlu0 %2005
        %2007 = vrot.lane.b32.xlu0 %v2003, 127
        %v2008 = vpop.permute.xlu0 %2007
        %v2011 = vadd.f32 %v1994, %v2006
        %v2012 = vadd.f32 %v1995, %v2008
        %s2013 = sld [smem:[#allocation6 + $0x211]]
        %v2014 = vstv %s2013
        %v2015 = vmul.f32 %v2014, %v222
        %v2016 = vmul.f32 %v2014, %v223
        %v2019 = vrot.slane %v2015, 2
        %v2020 = vrot.slane %v2016, 2
        %v2021 = vsel %vm316, %v2019, %v2020
        %2022 = vrot.lane.b32.xlu0 %v2021, 126
        %v2023 = vpop.permute.xlu0 %2022
        %2024 = vrot.lane.b32.xlu0 %v2020, 126
        %v2025 = vpop.permute.xlu0 %2024
        %v2028 = vadd.f32 %v2011, %v2023
        %v2029 = vadd.f32 %v2012, %v2025
        %s2030 = sld [smem:[#allocation6 + $0x212]]
        %v2031 = vstv %s2030
        %v2032 = vmul.f32 %v2031, %v224
        %v2033 = vmul.f32 %v2031, %v225
        %v2034 = vadd.f32 %v2028, %v2032
        %v2035 = vadd.f32 %v2029, %v2033
        %s2036 = sld [smem:[#allocation6 + $0x213]]
        %v2037 = vstv %s2036
        %v2038 = vmul.f32 %v2037, %v224
        %v2039 = vmul.f32 %v2037, %v225
        %2042 = vrot.lane.b32.xlu0 %v2038, 127
        %v2043 = vpop.permute.xlu0 %2042
        %2044 = vrot.lane.b32.xlu0 %v2039, 127
        %v2045 = vpop.permute.xlu0 %2044
        %v2048 = vadd.f32 %v2034, %v2043
        %v2049 = vadd.f32 %v2035, %v2045
        %s2050 = sld [smem:[#allocation6 + $0x214]]
        %v2051 = vstv %s2050
        %v2052 = vmul.f32 %v2051, %v224
        %v2053 = vmul.f32 %v2051, %v225
        %2056 = vrot.lane.b32.xlu0 %v2052, 126
        %v2057 = vpop.permute.xlu0 %2056
        %2058 = vrot.lane.b32.xlu0 %v2053, 126
        %v2059 = vpop.permute.xlu0 %2058
        %v2062 = vadd.f32 %v2048, %v2057
        %v2063 = vadd.f32 %v2049, %v2059
        %s2064 = sld [smem:[#allocation6 + $0x215]]
        %v2065 = vstv %s2064
        %v2066 = vmul.f32 %v2065, %v224
        %v2067 = vmul.f32 %v2065, %v225
        %v2070 = vrot.slane %v2066, 1
        %v2071 = vrot.slane %v2067, 1
        %v2072 = vsel %vm268, %v2070, %v2071
        %v2075 = vadd.f32 %v2062, %v2072
        %v2076 = vadd.f32 %v2063, %v2071
        %s2077 = sld [smem:[#allocation6 + $0x216]]
        %v2078 = vstv %s2077
        %v2079 = vmul.f32 %v2078, %v224
        %v2080 = vmul.f32 %v2078, %v225
        %v2083 = vrot.slane %v2079, 1
        %v2084 = vrot.slane %v2080, 1
        %v2085 = vsel %vm268, %v2083, %v2084
        %2086 = vrot.lane.b32.xlu0 %v2085, 127
        %v2087 = vpop.permute.xlu0 %2086
        %2088 = vrot.lane.b32.xlu0 %v2084, 127
        %v2089 = vpop.permute.xlu0 %2088
        %v2092 = vadd.f32 %v2075, %v2087
        %v2093 = vadd.f32 %v2076, %v2089
        %s2094 = sld [smem:[#allocation6 + $0x217]]
        %v2095 = vstv %s2094
        %v2096 = vmul.f32 %v2095, %v224
        %v2097 = vmul.f32 %v2095, %v225
        %v2100 = vrot.slane %v2096, 1
        %v2101 = vrot.slane %v2097, 1
        %v2102 = vsel %vm268, %v2100, %v2101
        %2103 = vrot.lane.b32.xlu0 %v2102, 126
        %v2104 = vpop.permute.xlu0 %2103
        %2105 = vrot.lane.b32.xlu0 %v2101, 126
        %v2106 = vpop.permute.xlu0 %2105
        %v2109 = vadd.f32 %v2092, %v2104
        %v2110 = vadd.f32 %v2093, %v2106
        %s2111 = sld [smem:[#allocation6 + $0x218]]
        %v2112 = vstv %s2111
        %v2113 = vmul.f32 %v2112, %v224
        %v2114 = vmul.f32 %v2112, %v225
        %v2117 = vrot.slane %v2113, 2
        %v2118 = vrot.slane %v2114, 2
        %v2119 = vsel %vm316, %v2117, %v2118
        %v2122 = vadd.f32 %v2109, %v2119
        %v2123 = vadd.f32 %v2110, %v2118
        %s2124 = sld [smem:[#allocation6 + $0x219]]
        %v2125 = vstv %s2124
        %v2126 = vmul.f32 %v2125, %v224
        %v2127 = vmul.f32 %v2125, %v225
        %v2130 = vrot.slane %v2126, 2
        %v2131 = vrot.slane %v2127, 2
        %v2132 = vsel %vm316, %v2130, %v2131
        %2133 = vrot.lane.b32.xlu0 %v2132, 127
        %v2134 = vpop.permute.xlu0 %2133
        %2135 = vrot.lane.b32.xlu0 %v2131, 127
        %v2136 = vpop.permute.xlu0 %2135
        %v2139 = vadd.f32 %v2122, %v2134
        %v2140 = vadd.f32 %v2123, %v2136
        %s2141 = sld [smem:[#allocation6 + $0x21a]]
        %v2142 = vstv %s2141
        %v2143 = vmul.f32 %v2142, %v224
        %v2144 = vmul.f32 %v2142, %v225
        %v2147 = vrot.slane %v2143, 2
        %v2148 = vrot.slane %v2144, 2
        %v2149 = vsel %vm316, %v2147, %v2148
        %2150 = vrot.lane.b32.xlu0 %v2149, 126
        %v2151 = vpop.permute.xlu0 %2150
        %2152 = vrot.lane.b32.xlu0 %v2148, 126
        %v2153 = vpop.permute.xlu0 %2152
        %v2156 = vadd.f32 %v2139, %v2151
        %v2157 = vadd.f32 %v2140, %v2153
        %s2158 = sld [smem:[#allocation7 + $0x5]]
        %v2159 = vstv %s2158
        %s2160 = sld [smem:[#allocation6 + $0x280]]
        %v2161 = vstv %s2160
        %v2162 = vmul.f32 %v2161, %v220
        %v2163 = vmul.f32 %v2161, %v221
        %v2164 = vadd.f32 %v2159, %v2162
        %v2165 = vadd.f32 %v2159, %v2163
        %s2166 = sld [smem:[#allocation6 + $0x281]]
        %v2167 = vstv %s2166
        %v2168 = vmul.f32 %v2167, %v220
        %v2169 = vmul.f32 %v2167, %v221
        %2172 = vrot.lane.b32.xlu0 %v2168, 127
        %v2173 = vpop.permute.xlu0 %2172
        %2174 = vrot.lane.b32.xlu0 %v2169, 127
        %v2175 = vpop.permute.xlu0 %2174
        %v2178 = vadd.f32 %v2164, %v2173
        %v2179 = vadd.f32 %v2165, %v2175
        %s2180 = sld [smem:[#allocation6 + $0x282]]
        %v2181 = vstv %s2180
        %v2182 = vmul.f32 %v2181, %v220
        %v2183 = vmul.f32 %v2181, %v221
        %2186 = vrot.lane.b32.xlu0 %v2182, 126
        %v2187 = vpop.permute.xlu0 %2186
        %2188 = vrot.lane.b32.xlu0 %v2183, 126
        %v2189 = vpop.permute.xlu0 %2188
        %v2192 = vadd.f32 %v2178, %v2187
        %v2193 = vadd.f32 %v2179, %v2189
        %s2194 = sld [smem:[#allocation6 + $0x283]]
        %v2195 = vstv %s2194
        %v2196 = vmul.f32 %v2195, %v220
        %v2197 = vmul.f32 %v2195, %v221
        %v2200 = vrot.slane %v2196, 1
        %v2201 = vrot.slane %v2197, 1
        %v2202 = vsel %vm268, %v2200, %v2201
        %v2205 = vadd.f32 %v2192, %v2202
        %v2206 = vadd.f32 %v2193, %v2201
        %s2207 = sld [smem:[#allocation6 + $0x284]]
        %v2208 = vstv %s2207
        %v2209 = vmul.f32 %v2208, %v220
        %v2210 = vmul.f32 %v2208, %v221
        %v2213 = vrot.slane %v2209, 1
        %v2214 = vrot.slane %v2210, 1
        %v2215 = vsel %vm268, %v2213, %v2214
        %2216 = vrot.lane.b32.xlu0 %v2215, 127
        %v2217 = vpop.permute.xlu0 %2216
        %2218 = vrot.lane.b32.xlu0 %v2214, 127
        %v2219 = vpop.permute.xlu0 %2218
        %v2222 = vadd.f32 %v2205, %v2217
        %v2223 = vadd.f32 %v2206, %v2219
        %s2224 = sld [smem:[#allocation6 + $0x285]]
        %v2225 = vstv %s2224
        %v2226 = vmul.f32 %v2225, %v220
        %v2227 = vmul.f32 %v2225, %v221
        %v2230 = vrot.slane %v2226, 1
        %v2231 = vrot.slane %v2227, 1
        %v2232 = vsel %vm268, %v2230, %v2231
        %2233 = vrot.lane.b32.xlu0 %v2232, 126
        %v2234 = vpop.permute.xlu0 %2233
        %2235 = vrot.lane.b32.xlu0 %v2231, 126
        %v2236 = vpop.permute.xlu0 %2235
        %v2239 = vadd.f32 %v2222, %v2234
        %v2240 = vadd.f32 %v2223, %v2236
        %s2241 = sld [smem:[#allocation6 + $0x286]]
        %v2242 = vstv %s2241
        %v2243 = vmul.f32 %v2242, %v220
        %v2244 = vmul.f32 %v2242, %v221
        %v2247 = vrot.slane %v2243, 2
        %v2248 = vrot.slane %v2244, 2
        %v2249 = vsel %vm316, %v2247, %v2248
        %v2252 = vadd.f32 %v2239, %v2249
        %v2253 = vadd.f32 %v2240, %v2248
        %s2254 = sld [smem:[#allocation6 + $0x287]]
        %v2255 = vstv %s2254
        %v2256 = vmul.f32 %v2255, %v220
        %v2257 = vmul.f32 %v2255, %v221
        %v2260 = vrot.slane %v2256, 2
        %v2261 = vrot.slane %v2257, 2
        %v2262 = vsel %vm316, %v2260, %v2261
        %2263 = vrot.lane.b32.xlu0 %v2262, 127
        %v2264 = vpop.permute.xlu0 %2263
        %2265 = vrot.lane.b32.xlu0 %v2261, 127
        %v2266 = vpop.permute.xlu0 %2265
        %v2269 = vadd.f32 %v2252, %v2264
        %v2270 = vadd.f32 %v2253, %v2266
        %s2271 = sld [smem:[#allocation6 + $0x288]]
        %v2272 = vstv %s2271
        %v2273 = vmul.f32 %v2272, %v220
        %v2274 = vmul.f32 %v2272, %v221
        %v2277 = vrot.slane %v2273, 2
        %v2278 = vrot.slane %v2274, 2
        %v2279 = vsel %vm316, %v2277, %v2278
        %2280 = vrot.lane.b32.xlu0 %v2279, 126
        %v2281 = vpop.permute.xlu0 %2280
        %2282 = vrot.lane.b32.xlu0 %v2278, 126
        %v2283 = vpop.permute.xlu0 %2282
        %v2286 = vadd.f32 %v2269, %v2281
        %v2287 = vadd.f32 %v2270, %v2283
        %s2288 = sld [smem:[#allocation6 + $0x289]]
        %v2289 = vstv %s2288
        %v2290 = vmul.f32 %v2289, %v222
        %v2291 = vmul.f32 %v2289, %v223
        %v2292 = vadd.f32 %v2286, %v2290
        %v2293 = vadd.f32 %v2287, %v2291
        %s2294 = sld [smem:[#allocation6 + $0x28a]]
        %v2295 = vstv %s2294
        %v2296 = vmul.f32 %v2295, %v222
        %v2297 = vmul.f32 %v2295, %v223
        %2300 = vrot.lane.b32.xlu0 %v2296, 127
        %v2301 = vpop.permute.xlu0 %2300
        %2302 = vrot.lane.b32.xlu0 %v2297, 127
        %v2303 = vpop.permute.xlu0 %2302
        %v2306 = vadd.f32 %v2292, %v2301
        %v2307 = vadd.f32 %v2293, %v2303
        %s2308 = sld [smem:[#allocation6 + $0x28b]]
        %v2309 = vstv %s2308
        %v2310 = vmul.f32 %v2309, %v222
        %v2311 = vmul.f32 %v2309, %v223
        %2314 = vrot.lane.b32.xlu0 %v2310, 126
        %v2315 = vpop.permute.xlu0 %2314
        %2316 = vrot.lane.b32.xlu0 %v2311, 126
        %v2317 = vpop.permute.xlu0 %2316
        %v2320 = vadd.f32 %v2306, %v2315
        %v2321 = vadd.f32 %v2307, %v2317
        %s2322 = sld [smem:[#allocation6 + $0x28c]]
        %v2323 = vstv %s2322
        %v2324 = vmul.f32 %v2323, %v222
        %v2325 = vmul.f32 %v2323, %v223
        %v2328 = vrot.slane %v2324, 1
        %v2329 = vrot.slane %v2325, 1
        %v2330 = vsel %vm268, %v2328, %v2329
        %v2333 = vadd.f32 %v2320, %v2330
        %v2334 = vadd.f32 %v2321, %v2329
        %s2335 = sld [smem:[#allocation6 + $0x28d]]
        %v2336 = vstv %s2335
        %v2337 = vmul.f32 %v2336, %v222
        %v2338 = vmul.f32 %v2336, %v223
        %v2341 = vrot.slane %v2337, 1
        %v2342 = vrot.slane %v2338, 1
        %v2343 = vsel %vm268, %v2341, %v2342
        %2344 = vrot.lane.b32.xlu0 %v2343, 127
        %v2345 = vpop.permute.xlu0 %2344
        %2346 = vrot.lane.b32.xlu0 %v2342, 127
        %v2347 = vpop.permute.xlu0 %2346
        %v2350 = vadd.f32 %v2333, %v2345
        %v2351 = vadd.f32 %v2334, %v2347
        %s2352 = sld [smem:[#allocation6 + $0x28e]]
        %v2353 = vstv %s2352
        %v2354 = vmul.f32 %v2353, %v222
        %v2355 = vmul.f32 %v2353, %v223
        %v2358 = vrot.slane %v2354, 1
        %v2359 = vrot.slane %v2355, 1
        %v2360 = vsel %vm268, %v2358, %v2359
        %2361 = vrot.lane.b32.xlu0 %v2360, 126
        %v2362 = vpop.permute.xlu0 %2361
        %2363 = vrot.lane.b32.xlu0 %v2359, 126
        %v2364 = vpop.permute.xlu0 %2363
        %v2367 = vadd.f32 %v2350, %v2362
        %v2368 = vadd.f32 %v2351, %v2364
        %s2369 = sld [smem:[#allocation6 + $0x28f]]
        %v2370 = vstv %s2369
        %v2371 = vmul.f32 %v2370, %v222
        %v2372 = vmul.f32 %v2370, %v223
        %v2375 = vrot.slane %v2371, 2
        %v2376 = vrot.slane %v2372, 2
        %v2377 = vsel %vm316, %v2375, %v2376
        %v2380 = vadd.f32 %v2367, %v2377
        %v2381 = vadd.f32 %v2368, %v2376
        %s2382 = sld [smem:[#allocation6 + $0x290]]
        %v2383 = vstv %s2382
        %v2384 = vmul.f32 %v2383, %v222
        %v2385 = vmul.f32 %v2383, %v223
        %v2388 = vrot.slane %v2384, 2
        %v2389 = vrot.slane %v2385, 2
        %v2390 = vsel %vm316, %v2388, %v2389
        %2391 = vrot.lane.b32.xlu0 %v2390, 127
        %v2392 = vpop.permute.xlu0 %2391
        %2393 = vrot.lane.b32.xlu0 %v2389, 127
        %v2394 = vpop.permute.xlu0 %2393
        %v2397 = vadd.f32 %v2380, %v2392
        %v2398 = vadd.f32 %v2381, %v2394
        %s2399 = sld [smem:[#allocation6 + $0x291]]
        %v2400 = vstv %s2399
        %v2401 = vmul.f32 %v2400, %v222
        %v2402 = vmul.f32 %v2400, %v223
        %v2405 = vrot.slane %v2401, 2
        %v2406 = vrot.slane %v2402, 2
        %v2407 = vsel %vm316, %v2405, %v2406
        %2408 = vrot.lane.b32.xlu0 %v2407, 126
        %v2409 = vpop.permute.xlu0 %2408
        %2410 = vrot.lane.b32.xlu0 %v2406, 126
        %v2411 = vpop.permute.xlu0 %2410
        %v2414 = vadd.f32 %v2397, %v2409
        %v2415 = vadd.f32 %v2398, %v2411
        %s2416 = sld [smem:[#allocation6 + $0x292]]
        %v2417 = vstv %s2416
        %v2418 = vmul.f32 %v2417, %v224
        %v2419 = vmul.f32 %v2417, %v225
        %v2420 = vadd.f32 %v2414, %v2418
        %v2421 = vadd.f32 %v2415, %v2419
        %s2422 = sld [smem:[#allocation6 + $0x293]]
        %v2423 = vstv %s2422
        %v2424 = vmul.f32 %v2423, %v224
        %v2425 = vmul.f32 %v2423, %v225
        %2428 = vrot.lane.b32.xlu0 %v2424, 127
        %v2429 = vpop.permute.xlu0 %2428
        %2430 = vrot.lane.b32.xlu0 %v2425, 127
        %v2431 = vpop.permute.xlu0 %2430
        %v2434 = vadd.f32 %v2420, %v2429
        %v2435 = vadd.f32 %v2421, %v2431
        %s2436 = sld [smem:[#allocation6 + $0x294]]
        %v2437 = vstv %s2436
        %v2438 = vmul.f32 %v2437, %v224
        %v2439 = vmul.f32 %v2437, %v225
        %2442 = vrot.lane.b32.xlu0 %v2438, 126
        %v2443 = vpop.permute.xlu0 %2442
        %2444 = vrot.lane.b32.xlu0 %v2439, 126
        %v2445 = vpop.permute.xlu0 %2444
        %v2448 = vadd.f32 %v2434, %v2443
        %v2449 = vadd.f32 %v2435, %v2445
        %s2450 = sld [smem:[#allocation6 + $0x295]]
        %v2451 = vstv %s2450
        %v2452 = vmul.f32 %v2451, %v224
        %v2453 = vmul.f32 %v2451, %v225
        %v2456 = vrot.slane %v2452, 1
        %v2457 = vrot.slane %v2453, 1
        %v2458 = vsel %vm268, %v2456, %v2457
        %v2461 = vadd.f32 %v2448, %v2458
        %v2462 = vadd.f32 %v2449, %v2457
        %s2463 = sld [smem:[#allocation6 + $0x296]]
        %v2464 = vstv %s2463
        %v2465 = vmul.f32 %v2464, %v224
        %v2466 = vmul.f32 %v2464, %v225
        %v2469 = vrot.slane %v2465, 1
        %v2470 = vrot.slane %v2466, 1
        %v2471 = vsel %vm268, %v2469, %v2470
        %2472 = vrot.lane.b32.xlu0 %v2471, 127
        %v2473 = vpop.permute.xlu0 %2472
        %2474 = vrot.lane.b32.xlu0 %v2470, 127
        %v2475 = vpop.permute.xlu0 %2474
        %v2478 = vadd.f32 %v2461, %v2473
        %v2479 = vadd.f32 %v2462, %v2475
        %s2480 = sld [smem:[#allocation6 + $0x297]]
        %v2481 = vstv %s2480
        %v2482 = vmul.f32 %v2481, %v224
        %v2483 = vmul.f32 %v2481, %v225
        %v2486 = vrot.slane %v2482, 1
        %v2487 = vrot.slane %v2483, 1
        %v2488 = vsel %vm268, %v2486, %v2487
        %2489 = vrot.lane.b32.xlu0 %v2488, 126
        %v2490 = vpop.permute.xlu0 %2489
        %2491 = vrot.lane.b32.xlu0 %v2487, 126
        %v2492 = vpop.permute.xlu0 %2491
        %v2495 = vadd.f32 %v2478, %v2490
        %v2496 = vadd.f32 %v2479, %v2492
        %s2497 = sld [smem:[#allocation6 + $0x298]]
        %v2498 = vstv %s2497
        %v2499 = vmul.f32 %v2498, %v224
        %v2500 = vmul.f32 %v2498, %v225
        %v2503 = vrot.slane %v2499, 2
        %v2504 = vrot.slane %v2500, 2
        %v2505 = vsel %vm316, %v2503, %v2504
        %v2508 = vadd.f32 %v2495, %v2505
        %v2509 = vadd.f32 %v2496, %v2504
        %s2510 = sld [smem:[#allocation6 + $0x299]]
        %v2511 = vstv %s2510
        %v2512 = vmul.f32 %v2511, %v224
        %v2513 = vmul.f32 %v2511, %v225
        %v2516 = vrot.slane %v2512, 2
        %v2517 = vrot.slane %v2513, 2
        %v2518 = vsel %vm316, %v2516, %v2517
        %2519 = vrot.lane.b32.xlu0 %v2518, 127
        %v2520 = vpop.permute.xlu0 %2519
        %2521 = vrot.lane.b32.xlu0 %v2517, 127
        %v2522 = vpop.permute.xlu0 %2521
        %v2525 = vadd.f32 %v2508, %v2520
        %v2526 = vadd.f32 %v2509, %v2522
        %s2527 = sld [smem:[#allocation6 + $0x29a]]
        %v2528 = vstv %s2527
        %v2529 = vmul.f32 %v2528, %v224
        %v2530 = vmul.f32 %v2528, %v225
        %v2533 = vrot.slane %v2529, 2
        %v2534 = vrot.slane %v2530, 2
        %v2535 = vsel %vm316, %v2533, %v2534
        %2536 = vrot.lane.b32.xlu0 %v2535, 126
        %v2537 = vpop.permute.xlu0 %2536
        %2538 = vrot.lane.b32.xlu0 %v2534, 126
        %v2539 = vpop.permute.xlu0 %2538
        %v2542 = vadd.f32 %v2525, %v2537
        %v2543 = vadd.f32 %v2526, %v2539
        %vm2544 = vcmask 113664
        %2545 = vst.msk [vmem:[%s219] sm:$0xff] %vm2544, %v612
        %vm2546 = vcmask 111616
        %2547 = vst.msk [vmem:[%s219 + $0x8] sm:$0x3f] %vm2546, %v613
        %2548 = vst.msk [vmem:[%s219 + $0x10] sm:$0xff] %vm2544, %v998
        %2549 = vst.msk [vmem:[%s219 + $0x18] sm:$0x3f] %vm2546, %v999
        %2550 = vst.msk [vmem:[%s219 + $0x20] sm:$0xff] %vm2544, %v1384
        %2551 = vst.msk [vmem:[%s219 + $0x28] sm:$0x3f] %vm2546, %v1385
        %2552 = vst.msk [vmem:[%s219 + $0x30] sm:$0xff] %vm2544, %v1770
        %2553 = vst.msk [vmem:[%s219 + $0x38] sm:$0x3f] %vm2546, %v1771
        %2554 = vst.msk [vmem:[%s219 + $0x40] sm:$0xff] %vm2544, %v2156
        %2555 = vst.msk [vmem:[%s219 + $0x48] sm:$0x3f] %vm2546, %v2157
        %2556 = vst.msk [vmem:[%s219 + $0x50] sm:$0xff] %vm2544, %v2542
        %2557 = vst.msk [vmem:[%s219 + $0x58] sm:$0x3f] %vm2546, %v2543
        %p2558 = scmp.lt.s32.totalorder %s19, 1
        %s2559 = scalar_select %p2558, %s19, 1
        %s2560 = smul.addr %s2559, 12
        %s2561 = smul.addr %s2560, 8
        %s2562 = scalar_lea.vmem %s3, %s2561
        // Predicated region
        $region45: #{tpu_custom_call.1} parent=31 // pred_check
          %p2563 = pneg %p105
        $region46: #{tpu_custom_call.1} parent=31 // pred_check_branch
          %2565 = sbr.rel (%p2563) target = $region48
        $region47: #{tpu_custom_call.1} parent=31 // pred_region
          _
        $region48: #{tpu_custom_call.1} parent=31 // pred_fallthru
          _
      $region32: #{tpu_custom_call.1} parent=5 // pred_fallthru
        _
      %p2566 = scmp.le.s32.totalorder 2, %s14
      // Predicated region
      $region49: #{tpu_custom_call.1} parent=5 // pred_check
        %p2567 = pneg %p2566
      $region50: #{tpu_custom_call.1} parent=5 // pred_check_branch
        %2569 = sbr.rel (%p2567) target = $region52
      $region51: #{tpu_custom_call.1} parent=5 // pred_region
        %s2570 = ssub.s32 %s14, 2
        // Predicated region
        $region53: #{tpu_custom_call.1} parent=51 // pred_check
          %p2571 = pneg %p111
        $region54: #{tpu_custom_call.1} parent=51 // pred_check_branch
          %2573 = sbr.rel (%p2571) target = $region56
        $region55: #{tpu_custom_call.1} parent=51 // pred_region
          %p2574 = scmp.lt.s32.totalorder %s20, 1
          %s2575 = scalar_select %p2574, %s20, 1
          %s2576 = smul.addr %s2575, 12
          %s2577 = smul.addr %s2576, 8
          %s2578 = scalar_lea.vmem %s3, %s2577
        $region56: #{tpu_custom_call.1} parent=51 // pred_fallthru
          _
      $region52: #{tpu_custom_call.1} parent=5 // pred_fallthru
        _
    $region6: #{tpu_custom_call.1} parent=1 // loop_footer
      %s18 = sadd.s32 1, %s14
    $region7: #{tpu_custom_call.1} parent=1 // loop_footer_branch
      %13 = sbr.rel target = $region3
    $region8: #{tpu_custom_call.1} parent=1 // loop_exit
      _
    %2579 = vsyncpa [#allocation3], 1
    %s2580 = scalar_lea.sflag [#allocation3], 1
    %2581 = vsyncpa %s2580, 1
    %2582 = vsyncpa [#allocation4], 1
    %s2583 = scalar_lea.sflag [#allocation4], 1
    %2584 = vsyncpa %s2583, 1
    %2585 = vsyncpa [#allocation5], 1
    %s2586 = scalar_lea.sflag [#allocation5], 1
    %2587 = vsyncpa %s2586, 1

</llo_original>
